<compile_context>
chip_gen: v5e
topology: v5e:2x2
jax: 0.10.0
libtpu: 0.0.40
codegen_flags: <defaults>
</compile_context>

<pallas_src>
import functools

import jax
import jax.numpy as jnp
from jax.experimental import pallas as pl
from jax.experimental.pallas import tpu as pltpu


def net2_kernel(x_ref, w1_ref, lnp_ref, wih_ref, whh_ref, gb_ref,
                whead_ref, bhead_ref, pred_ref, *, hidden_pad, time_len, eps):
    HP = hidden_pad                      # gate width, padded to a 128-lane tile
    T = time_len
    _, B, F = x_ref.shape                # x is time-major (T, B, F)

    # ---- hoisted, time-invariant work (done once for all time steps) ----
    # glb_input_map: Linear -> ReLU -> LayerNorm -> Dropout(identity, eval)
    # TODO(synk): Dropout treated as identity (eval mode); stochastic dropout
    # for training is not implemented.
    x = x_ref[...].reshape(T * B, F)             # rows ordered (t, b)
    b1 = lnp_ref[0:1, :]
    gain = lnp_ref[1:2, :]
    beta = lnp_ref[2:3, :]
    e = jnp.dot(x, w1_ref[...], preferred_element_type=jnp.float32,
                precision=jax.lax.Precision.DEFAULT) + b1
    e = jnp.maximum(e, 0.0)
    mu = jnp.mean(e, axis=-1, keepdims=True)
    var = jnp.maximum(jnp.mean(e * e, axis=-1, keepdims=True) - mu * mu, 0.0)
    e = (e - mu) * jax.lax.rsqrt(var + eps) * gain + beta

    # Input-projection hoist: x-dependent GRU gate pre-activations for all t,
    # produced time-major so the recurrence indexes the leading axis.
    bih = gb_ref[0:1, :]
    bhh = gb_ref[1:2, :]
    gx_all = (jnp.dot(e, wih_ref[...], preferred_element_type=jnp.float32,
                      precision=jax.lax.Precision.DEFAULT)
              + bih).reshape(T, B, 3 * HP)

    whh = whh_ref[...]                           # (HP, 3*HP), gate-aligned

    # ---- sequential GRU recurrence (PyTorch gate order r, z, n) ----
    # Fully unrolled at trace time: T is a small static Python int.
    # Padded lanes of h stay exactly 0 (biases/weights zero there =>
    # r_pad = z_pad = 0.5, n_pad = 0, h_pad_new = 0.5*0 + 0.5*0 = 0).
    h = jnp.zeros((B, HP), jnp.float32)          # glb_init_hidden: zeros
    for t in range(T):
        gx = gx_all[t]                           # (B, 3*HP) leading-axis view
        gh = jnp.dot(h, whh, preferred_element_type=jnp.float32,
                     precision=jax.lax.Precision.DEFAULT) + bhh
        rz = jax.nn.sigmoid(gx[:, :2 * HP] + gh[:, :2 * HP])  # fused r|z sigmoid
        r = rz[:, :HP]
        z = rz[:, HP:]
        n = jnp.tanh(gx[:, 2 * HP:] + r * gh[:, 2 * HP:])
        h = (1.0 - z) * n + z * h

    # ---- fused head: cls(glb_gru2out(h_T)) as a single matmul ----
    pred_ref[...] = (jnp.dot(h, whead_ref[...],
                             preferred_element_type=jnp.float32,
                             precision=jax.lax.Precision.DEFAULT)
                     + bhead_ref[...])


def net2_forward(x_glb, prep, eps=1e-6):
    """x_glb: (B, T, F) float32; prep: output of prepare_params.
    Returns pred: (B, C) float32."""
    # TODO(synk): the reference uses a custom LayerNorm class with unspecified
    # eps; PyTorch nn.LayerNorm default is 1e-5 — adjust `eps` if needed.
    B, T, F = x_glb.shape
    HP = prep["whh"].shape[0]
    C = prep["w_head"].shape[1]

    # One-time, off-critical-path transpose to time-major layout.
    x_tm = jnp.transpose(x_glb, (1, 0, 2))       # (T, B, F)

    kernel = functools.partial(net2_kernel, hidden_pad=HP, time_len=T, eps=eps)
    vmem_spec = functools.partial(pl.BlockSpec,
                                  memory_space=pltpu.MemorySpace.VMEM)

    # Grid-less call: everything fits trivially in VMEM; no pipelining needed.
    pred = pl.pallas_call(
        kernel,
        out_shape=jax.ShapeDtypeStruct((B, C), jnp.float32),
        in_specs=[vmem_spec() for _ in range(8)],
        out_specs=vmem_spec(),
    )(x_tm, prep["w1"], prep["ln_pack"], prep["wih"], prep["whh"],
      prep["gru_b"], prep["w_head"], prep["b_head"])
    return pred


def prepare_params(p, lane=128):
    """One-time packing/fusion of raw (PyTorch-layout) params for the kernel.

    Gates are padded so gate g occupies lanes [g*HP, g*HP + H) of a 3*HP wide
    buffer (HP = H rounded up to `lane`); the hidden state is carried padded
    to HP.  Padded lanes of weights/biases are zero, which keeps the padded
    lanes of h exactly zero throughout the recurrence (result is exact).
    """
    H = p["whh"].shape[0]
    HP = ((H + lane - 1) // lane) * lane
    C = p["wcls"].shape[1]

    def pad_gate_cols(w):                          # (rows, 3H) -> (rows, 3HP)
        out = jnp.zeros((w.shape[0], 3 * HP), jnp.float32)
        for g in range(3):
            out = out.at[:, g * HP:g * HP + H].set(w[:, g * H:(g + 1) * H])
        return out

    wih_p = pad_gate_cols(p["wih"])                              # (E, 3HP)
    whh_p = jnp.zeros((HP, 3 * HP), jnp.float32)
    whh_p = whh_p.at[:H, :].set(pad_gate_cols(p["whh"]))         # (HP, 3HP)
    bih_p = pad_gate_cols(p["bih"])                              # (1, 3HP)
    bhh_p = pad_gate_cols(p["bhh"])                              # (1, 3HP)

    # Fused head: cls(gru2out(h)) = h @ (Wout @ Wcls) + (bout @ Wcls + bcls)
    w_head = p["wout"] @ p["wcls"]                               # (H, C)
    b_head = p["bout"] @ p["wcls"] + p["bcls"]                   # (1, C)
    w_head_p = jnp.zeros((HP, C), jnp.float32).at[:H, :].set(w_head)

    return {
        "w1": p["w1"],
        "ln_pack": jnp.concatenate([p["b1"], p["gain"], p["bias"]], axis=0),
        "wih": wih_p,
        "whh": whh_p,
        "gru_b": jnp.concatenate([bih_p, bhh_p], axis=0),
        "w_head": w_head_p,
        "b_head": b_head,
    }


def init_params(key, feature_dim, emb_dim, hidden_dim, out_dim, num_classes):
    ks = jax.random.split(key, 10)

    def u(k, shape, fan_in):
        bound = 1.0 / jnp.sqrt(fan_in)
        return jax.random.uniform(k, shape, jnp.float32, -bound, bound)

    return {
        # glb_input_map Linear + LayerNorm
        "w1": u(ks[0], (feature_dim, emb_dim), feature_dim),
        "b1": u(ks[1], (1, emb_dim), feature_dim),
        "gain": jnp.ones((1, emb_dim), jnp.float32),
        "bias": jnp.zeros((1, emb_dim), jnp.float32),
        # GRU (PyTorch weight_ih/weight_hh transposed to (in, 3H), gates r|z|n)
        "wih": u(ks[2], (emb_dim, 3 * hidden_dim), hidden_dim),
        "bih": u(ks[3], (1, 3 * hidden_dim), hidden_dim),
        "whh": u(ks[4], (hidden_dim, 3 * hidden_dim), hidden_dim),
        "bhh": u(ks[5], (1, 3 * hidden_dim), hidden_dim),
        # glb_gru2out
        "wout": u(ks[6], (hidden_dim, out_dim), hidden_dim),
        "bout": u(ks[7], (1, out_dim), hidden_dim),
        # cls
        "wcls": u(ks[8], (out_dim, num_classes), out_dim),
        "bcls": u(ks[9], (1, num_classes), out_dim),
    }


if __name__ == "__main__":
    # x (B, T, J, 3) is shape-only in the reference forward; x_glb carries the
    # global features.
    B, T, J = 2, 8, 4
    FEAT, EMB, HID, OUT, NCLS = 16, 32, 32, 16, 5

    key = jax.random.PRNGKey(0)
    k_x, k_glb, k_p = jax.random.split(key, 3)
    x = jax.random.normal(k_x, (B, T, J, 3), jnp.float32)   # shape-only input
    x_glb = jax.random.normal(k_glb, (B, T, FEAT), jnp.float32)
    params = init_params(k_p, FEAT, EMB, HID, OUT, NCLS)
    prep = prepare_params(params)

    pred = net2_forward(x_glb, prep)
    pred = jax.block_until_ready(pred)
    assert pred.shape == (B, NCLS) and pred.dtype == jnp.float32
    assert bool(jnp.isfinite(pred).all())
    print("KERNEL_OK")
</pallas_src>

<mosaic_0001>
module attributes {stable_mosaic.version = 11 : i64} {
  func.func @net2_kernel(%arg0: memref<8x2x16xf32, #tpu.memory_space<vmem>>, %arg1: memref<16x32xf32, #tpu.memory_space<vmem>>, %arg2: memref<3x32xf32, #tpu.memory_space<vmem>>, %arg3: memref<32x384xf32, #tpu.memory_space<vmem>>, %arg4: memref<128x384xf32, #tpu.memory_space<vmem>>, %arg5: memref<2x384xf32, #tpu.memory_space<vmem>>, %arg6: memref<128x5xf32, #tpu.memory_space<vmem>>, %arg7: memref<1x5xf32, #tpu.memory_space<vmem>>, %arg8: memref<2x5xf32, #tpu.memory_space<vmem>>) attributes {dimension_semantics = [], scalar_prefetch = 0 : i64, scratch_operands = 0 : i64, tpu.core_type = #tpu.core_type<tc>} {
    %c0 = arith.constant 0 : index
    %c0_0 = arith.constant 0 : index
    %c0_1 = arith.constant 0 : index
    %0 = vector.load %arg0[%c0, %c0_0, %c0_1] : memref<8x2x16xf32, #tpu.memory_space<vmem>>, vector<8x2x16xf32>
    %1 = vector.shape_cast %0 : vector<8x2x16xf32> to vector<16x16xf32>
    %c0_2 = arith.constant 0 : index
    %c0_3 = arith.constant 0 : index
    %2 = vector.load %arg2[%c0_2, %c0_3] : memref<3x32xf32, #tpu.memory_space<vmem>>, vector<1x32xf32>
    %c1 = arith.constant 1 : index
    %c0_4 = arith.constant 0 : index
    %3 = vector.load %arg2[%c1, %c0_4] : memref<3x32xf32, #tpu.memory_space<vmem>>, vector<1x32xf32>
    %c2 = arith.constant 2 : index
    %c0_5 = arith.constant 0 : index
    %4 = vector.load %arg2[%c2, %c0_5] : memref<3x32xf32, #tpu.memory_space<vmem>>, vector<1x32xf32>
    %c0_6 = arith.constant 0 : index
    %c0_7 = arith.constant 0 : index
    %5 = vector.load %arg1[%c0_6, %c0_7] : memref<16x32xf32, #tpu.memory_space<vmem>>, vector<16x32xf32>
    %cst = arith.constant dense<0.000000e+00> : vector<16x32xf32>
    %6 = tpu.matmul %1, %5, %cst {dimension_numbers = #tpu.dot_dimension_numbers<[1], [0], [0], [1], [0, 0, 1, 1], [], []>} : vector<16x16xf32>, vector<16x32xf32>, vector<16x32xf32> -> vector<16x32xf32>
    %7 = vector.broadcast %2 : vector<1x32xf32> to vector<16x32xf32>
    %8 = arith.addf %6, %7 : vector<16x32xf32>
    %cst_8 = arith.constant 0.000000e+00 : f32
    %9 = vector.broadcast %cst_8 : f32 to vector<16x32xf32>
    %10 = arith.maximumf %8, %9 : vector<16x32xf32>
    %cst_9 = arith.constant dense<0.000000e+00> : vector<16xf32>
    %11 = vector.multi_reduction <add>, %10, %cst_9 [1] : vector<16x32xf32> to vector<16xf32>
    %12 = vector.shape_cast %11 : vector<16xf32> to vector<16x1xf32>
    %cst_10 = arith.constant 3.200000e+01 : f32
    %13 = vector.broadcast %cst_10 : f32 to vector<16x1xf32>
    %14 = arith.divf %12, %13 : vector<16x1xf32>
    %15 = arith.mulf %10, %10 : vector<16x32xf32>
    %cst_11 = arith.constant dense<0.000000e+00> : vector<16xf32>
    %16 = vector.multi_reduction <add>, %15, %cst_11 [1] : vector<16x32xf32> to vector<16xf32>
    %17 = vector.shape_cast %16 : vector<16xf32> to vector<16x1xf32>
    %cst_12 = arith.constant 3.200000e+01 : f32
    %18 = vector.broadcast %cst_12 : f32 to vector<16x1xf32>
    %19 = arith.divf %17, %18 : vector<16x1xf32>
    %20 = arith.mulf %14, %14 : vector<16x1xf32>
    %21 = arith.subf %19, %20 : vector<16x1xf32>
    %cst_13 = arith.constant 0.000000e+00 : f32
    %22 = vector.broadcast %cst_13 : f32 to vector<16x1xf32>
    %23 = arith.maximumf %21, %22 : vector<16x1xf32>
    %24 = vector.broadcast %14 : vector<16x1xf32> to vector<16x32xf32>
    %25 = arith.subf %10, %24 : vector<16x32xf32>
    %cst_14 = arith.constant 9.99999997E-7 : f32
    %26 = vector.broadcast %cst_14 : f32 to vector<16x1xf32>
    %27 = arith.addf %23, %26 : vector<16x1xf32>
    %28 = math.rsqrt %27 : vector<16x1xf32>
    %29 = vector.broadcast %28 : vector<16x1xf32> to vector<16x32xf32>
    %30 = arith.mulf %25, %29 : vector<16x32xf32>
    %31 = vector.broadcast %3 : vector<1x32xf32> to vector<16x32xf32>
    %32 = arith.mulf %30, %31 : vector<16x32xf32>
    %33 = vector.broadcast %4 : vector<1x32xf32> to vector<16x32xf32>
    %34 = arith.addf %32, %33 : vector<16x32xf32>
    %c0_15 = arith.constant 0 : index
    %c0_16 = arith.constant 0 : index
    %35 = vector.load %arg5[%c0_15, %c0_16] : memref<2x384xf32, #tpu.memory_space<vmem>>, vector<1x384xf32>
    %c1_17 = arith.constant 1 : index
    %c0_18 = arith.constant 0 : index
    %36 = vector.load %arg5[%c1_17, %c0_18] : memref<2x384xf32, #tpu.memory_space<vmem>>, vector<1x384xf32>
    %c0_19 = arith.constant 0 : index
    %c0_20 = arith.constant 0 : index
    %37 = vector.load %arg3[%c0_19, %c0_20] : memref<32x384xf32, #tpu.memory_space<vmem>>, vector<32x384xf32>
    %cst_21 = arith.constant dense<0.000000e+00> : vector<16x384xf32>
    %38 = tpu.matmul %34, %37, %cst_21 {dimension_numbers = #tpu.dot_dimension_numbers<[1], [0], [0], [1], [0, 0, 1, 1], [], []>} : vector<16x32xf32>, vector<32x384xf32>, vector<16x384xf32> -> vector<16x384xf32>
    %39 = vector.broadcast %35 : vector<1x384xf32> to vector<16x384xf32>
    %40 = arith.addf %38, %39 : vector<16x384xf32>
    %41 = vector.shape_cast %40 : vector<16x384xf32> to vector<8x2x384xf32>
    %c0_22 = arith.constant 0 : index
    %c0_23 = arith.constant 0 : index
    %42 = vector.load %arg4[%c0_22, %c0_23] : memref<128x384xf32, #tpu.memory_space<vmem>>, vector<128x384xf32>
    %cst_24 = arith.constant 0.000000e+00 : f32
    %43 = vector.broadcast %cst_24 : f32 to vector<2x128xf32>
    %44 = vector.extract_strided_slice %41 {offsets = [0, 0, 0], sizes = [1, 2, 384], strides = [1, 1, 1]} : vector<8x2x384xf32> to vector<1x2x384xf32>
    %45 = vector.shape_cast %44 : vector<1x2x384xf32> to vector<2x384xf32>
    %cst_25 = arith.constant dense<0.000000e+00> : vector<2x384xf32>
    %46 = tpu.matmul %43, %42, %cst_25 {dimension_numbers = #tpu.dot_dimension_numbers<[1], [0], [0], [1], [0, 0, 1, 1], [], []>} : vector<2x128xf32>, vector<128x384xf32>, vector<2x384xf32> -> vector<2x384xf32>
    %47 = vector.broadcast %36 : vector<1x384xf32> to vector<2x384xf32>
    %48 = arith.addf %46, %47 : vector<2x384xf32>
    %49 = vector.extract_strided_slice %45 {offsets = [0, 0], sizes = [2, 256], strides = [1, 1]} : vector<2x384xf32> to vector<2x256xf32>
    %50 = vector.extract_strided_slice %48 {offsets = [0, 0], sizes = [2, 256], strides = [1, 1]} : vector<2x384xf32> to vector<2x256xf32>
    %51 = arith.addf %49, %50 : vector<2x256xf32>
    %52 = arith.negf %51 : vector<2x256xf32>
    %53 = math.exp %52 : vector<2x256xf32>
    %cst_26 = arith.constant 1.000000e+00 : f32
    %54 = vector.broadcast %cst_26 : f32 to vector<2x256xf32>
    %55 = arith.addf %54, %53 : vector<2x256xf32>
    %56 = arith.divf %54, %55 : vector<2x256xf32>
    %57 = vector.extract_strided_slice %56 {offsets = [0, 0], sizes = [2, 128], strides = [1, 1]} : vector<2x256xf32> to vector<2x128xf32>
    %58 = vector.extract_strided_slice %56 {offsets = [0, 128], sizes = [2, 128], strides = [1, 1]} : vector<2x256xf32> to vector<2x128xf32>
    %59 = vector.extract_strided_slice %45 {offsets = [0, 256], sizes = [2, 128], strides = [1, 1]} : vector<2x384xf32> to vector<2x128xf32>
    %60 = vector.extract_strided_slice %48 {offsets = [0, 256], sizes = [2, 128], strides = [1, 1]} : vector<2x384xf32> to vector<2x128xf32>
    %61 = arith.mulf %57, %60 : vector<2x128xf32>
    %62 = arith.addf %59, %61 : vector<2x128xf32>
    %63 = math.tanh %62 : vector<2x128xf32>
    %cst_27 = arith.constant 1.000000e+00 : f32
    %64 = vector.broadcast %cst_27 : f32 to vector<2x128xf32>
    %65 = arith.subf %64, %58 : vector<2x128xf32>
    %66 = arith.mulf %65, %63 : vector<2x128xf32>
    %67 = arith.mulf %58, %43 : vector<2x128xf32>
    %68 = arith.addf %66, %67 : vector<2x128xf32>
    %69 = vector.extract_strided_slice %41 {offsets = [1, 0, 0], sizes = [1, 2, 384], strides = [1, 1, 1]} : vector<8x2x384xf32> to vector<1x2x384xf32>
    %70 = vector.shape_cast %69 : vector<1x2x384xf32> to vector<2x384xf32>
    %cst_28 = arith.constant dense<0.000000e+00> : vector<2x384xf32>
    %71 = tpu.matmul %68, %42, %cst_28 {dimension_numbers = #tpu.dot_dimension_numbers<[1], [0], [0], [1], [0, 0, 1, 1], [], []>} : vector<2x128xf32>, vector<128x384xf32>, vector<2x384xf32> -> vector<2x384xf32>
    %72 = vector.broadcast %36 : vector<1x384xf32> to vector<2x384xf32>
    %73 = arith.addf %71, %72 : vector<2x384xf32>
    %74 = vector.extract_strided_slice %70 {offsets = [0, 0], sizes = [2, 256], strides = [1, 1]} : vector<2x384xf32> to vector<2x256xf32>
    %75 = vector.extract_strided_slice %73 {offsets = [0, 0], sizes = [2, 256], strides = [1, 1]} : vector<2x384xf32> to vector<2x256xf32>
    %76 = arith.addf %74, %75 : vector<2x256xf32>
    %77 = arith.negf %76 : vector<2x256xf32>
    %78 = math.exp %77 : vector<2x256xf32>
    %cst_29 = arith.constant 1.000000e+00 : f32
    %79 = vector.broadcast %cst_29 : f32 to vector<2x256xf32>
    %80 = arith.addf %79, %78 : vector<2x256xf32>
    %81 = arith.divf %79, %80 : vector<2x256xf32>
    %82 = vector.extract_strided_slice %81 {offsets = [0, 0], sizes = [2, 128], strides = [1, 1]} : vector<2x256xf32> to vector<2x128xf32>
    %83 = vector.extract_strided_slice %81 {offsets = [0, 128], sizes = [2, 128], strides = [1, 1]} : vector<2x256xf32> to vector<2x128xf32>
    %84 = vector.extract_strided_slice %70 {offsets = [0, 256], sizes = [2, 128], strides = [1, 1]} : vector<2x384xf32> to vector<2x128xf32>
    %85 = vector.extract_strided_slice %73 {offsets = [0, 256], sizes = [2, 128], strides = [1, 1]} : vector<2x384xf32> to vector<2x128xf32>
    %86 = arith.mulf %82, %85 : vector<2x128xf32>
    %87 = arith.addf %84, %86 : vector<2x128xf32>
    %88 = math.tanh %87 : vector<2x128xf32>
    %cst_30 = arith.constant 1.000000e+00 : f32
    %89 = vector.broadcast %cst_30 : f32 to vector<2x128xf32>
    %90 = arith.subf %89, %83 : vector<2x128xf32>
    %91 = arith.mulf %90, %88 : vector<2x128xf32>
    %92 = arith.mulf %83, %68 : vector<2x128xf32>
    %93 = arith.addf %91, %92 : vector<2x128xf32>
    %94 = vector.extract_strided_slice %41 {offsets = [2, 0, 0], sizes = [1, 2, 384], strides = [1, 1, 1]} : vector<8x2x384xf32> to vector<1x2x384xf32>
    %95 = vector.shape_cast %94 : vector<1x2x384xf32> to vector<2x384xf32>
    %cst_31 = arith.constant dense<0.000000e+00> : vector<2x384xf32>
    %96 = tpu.matmul %93, %42, %cst_31 {dimension_numbers = #tpu.dot_dimension_numbers<[1], [0], [0], [1], [0, 0, 1, 1], [], []>} : vector<2x128xf32>, vector<128x384xf32>, vector<2x384xf32> -> vector<2x384xf32>
    %97 = vector.broadcast %36 : vector<1x384xf32> to vector<2x384xf32>
    %98 = arith.addf %96, %97 : vector<2x384xf32>
    %99 = vector.extract_strided_slice %95 {offsets = [0, 0], sizes = [2, 256], strides = [1, 1]} : vector<2x384xf32> to vector<2x256xf32>
    %100 = vector.extract_strided_slice %98 {offsets = [0, 0], sizes = [2, 256], strides = [1, 1]} : vector<2x384xf32> to vector<2x256xf32>
    %101 = arith.addf %99, %100 : vector<2x256xf32>
    %102 = arith.negf %101 : vector<2x256xf32>
    %103 = math.exp %102 : vector<2x256xf32>
    %cst_32 = arith.constant 1.000000e+00 : f32
    %104 = vector.broadcast %cst_32 : f32 to vector<2x256xf32>
    %105 = arith.addf %104, %103 : vector<2x256xf32>
    %106 = arith.divf %104, %105 : vector<2x256xf32>
    %107 = vector.extract_strided_slice %106 {offsets = [0, 0], sizes = [2, 128], strides = [1, 1]} : vector<2x256xf32> to vector<2x128xf32>
    %108 = vector.extract_strided_slice %106 {offsets = [0, 128], sizes = [2, 128], strides = [1, 1]} : vector<2x256xf32> to vector<2x128xf32>
    %109 = vector.extract_strided_slice %95 {offsets = [0, 256], sizes = [2, 128], strides = [1, 1]} : vector<2x384xf32> to vector<2x128xf32>
    %110 = vector.extract_strided_slice %98 {offsets = [0, 256], sizes = [2, 128], strides = [1, 1]} : vector<2x384xf32> to vector<2x128xf32>
    %111 = arith.mulf %107, %110 : vector<2x128xf32>
    %112 = arith.addf %109, %111 : vector<2x128xf32>
    %113 = math.tanh %112 : vector<2x128xf32>
    %cst_33 = arith.constant 1.000000e+00 : f32
    %114 = vector.broadcast %cst_33 : f32 to vector<2x128xf32>
    %115 = arith.subf %114, %108 : vector<2x128xf32>
    %116 = arith.mulf %115, %113 : vector<2x128xf32>
    %117 = arith.mulf %108, %93 : vector<2x128xf32>
    %118 = arith.addf %116, %117 : vector<2x128xf32>
    %119 = vector.extract_strided_slice %41 {offsets = [3, 0, 0], sizes = [1, 2, 384], strides = [1, 1, 1]} : vector<8x2x384xf32> to vector<1x2x384xf32>
    %120 = vector.shape_cast %119 : vector<1x2x384xf32> to vector<2x384xf32>
    %cst_34 = arith.constant dense<0.000000e+00> : vector<2x384xf32>
    %121 = tpu.matmul %118, %42, %cst_34 {dimension_numbers = #tpu.dot_dimension_numbers<[1], [0], [0], [1], [0, 0, 1, 1], [], []>} : vector<2x128xf32>, vector<128x384xf32>, vector<2x384xf32> -> vector<2x384xf32>
    %122 = vector.broadcast %36 : vector<1x384xf32> to vector<2x384xf32>
    %123 = arith.addf %121, %122 : vector<2x384xf32>
    %124 = vector.extract_strided_slice %120 {offsets = [0, 0], sizes = [2, 256], strides = [1, 1]} : vector<2x384xf32> to vector<2x256xf32>
    %125 = vector.extract_strided_slice %123 {offsets = [0, 0], sizes = [2, 256], strides = [1, 1]} : vector<2x384xf32> to vector<2x256xf32>
    %126 = arith.addf %124, %125 : vector<2x256xf32>
    %127 = arith.negf %126 : vector<2x256xf32>
    %128 = math.exp %127 : vector<2x256xf32>
    %cst_35 = arith.constant 1.000000e+00 : f32
    %129 = vector.broadcast %cst_35 : f32 to vector<2x256xf32>
    %130 = arith.addf %129, %128 : vector<2x256xf32>
    %131 = arith.divf %129, %130 : vector<2x256xf32>
    %132 = vector.extract_strided_slice %131 {offsets = [0, 0], sizes = [2, 128], strides = [1, 1]} : vector<2x256xf32> to vector<2x128xf32>
    %133 = vector.extract_strided_slice %131 {offsets = [0, 128], sizes = [2, 128], strides = [1, 1]} : vector<2x256xf32> to vector<2x128xf32>
    %134 = vector.extract_strided_slice %120 {offsets = [0, 256], sizes = [2, 128], strides = [1, 1]} : vector<2x384xf32> to vector<2x128xf32>
    %135 = vector.extract_strided_slice %123 {offsets = [0, 256], sizes = [2, 128], strides = [1, 1]} : vector<2x384xf32> to vector<2x128xf32>
    %136 = arith.mulf %132, %135 : vector<2x128xf32>
    %137 = arith.addf %134, %136 : vector<2x128xf32>
    %138 = math.tanh %137 : vector<2x128xf32>
    %cst_36 = arith.constant 1.000000e+00 : f32
    %139 = vector.broadcast %cst_36 : f32 to vector<2x128xf32>
    %140 = arith.subf %139, %133 : vector<2x128xf32>
    %141 = arith.mulf %140, %138 : vector<2x128xf32>
    %142 = arith.mulf %133, %118 : vector<2x128xf32>
    %143 = arith.addf %141, %142 : vector<2x128xf32>
    %144 = vector.extract_strided_slice %41 {offsets = [4, 0, 0], sizes = [1, 2, 384], strides = [1, 1, 1]} : vector<8x2x384xf32> to vector<1x2x384xf32>
    %145 = vector.shape_cast %144 : vector<1x2x384xf32> to vector<2x384xf32>
    %cst_37 = arith.constant dense<0.000000e+00> : vector<2x384xf32>
    %146 = tpu.matmul %143, %42, %cst_37 {dimension_numbers = #tpu.dot_dimension_numbers<[1], [0], [0], [1], [0, 0, 1, 1], [], []>} : vector<2x128xf32>, vector<128x384xf32>, vector<2x384xf32> -> vector<2x384xf32>
    %147 = vector.broadcast %36 : vector<1x384xf32> to vector<2x384xf32>
    %148 = arith.addf %146, %147 : vector<2x384xf32>
    %149 = vector.extract_strided_slice %145 {offsets = [0, 0], sizes = [2, 256], strides = [1, 1]} : vector<2x384xf32> to vector<2x256xf32>
    %150 = vector.extract_strided_slice %148 {offsets = [0, 0], sizes = [2, 256], strides = [1, 1]} : vector<2x384xf32> to vector<2x256xf32>
    %151 = arith.addf %149, %150 : vector<2x256xf32>
    %152 = arith.negf %151 : vector<2x256xf32>
    %153 = math.exp %152 : vector<2x256xf32>
    %cst_38 = arith.constant 1.000000e+00 : f32
    %154 = vector.broadcast %cst_38 : f32 to vector<2x256xf32>
    %155 = arith.addf %154, %153 : vector<2x256xf32>
    %156 = arith.divf %154, %155 : vector<2x256xf32>
    %157 = vector.extract_strided_slice %156 {offsets = [0, 0], sizes = [2, 128], strides = [1, 1]} : vector<2x256xf32> to vector<2x128xf32>
    %158 = vector.extract_strided_slice %156 {offsets = [0, 128], sizes = [2, 128], strides = [1, 1]} : vector<2x256xf32> to vector<2x128xf32>
    %159 = vector.extract_strided_slice %145 {offsets = [0, 256], sizes = [2, 128], strides = [1, 1]} : vector<2x384xf32> to vector<2x128xf32>
    %160 = vector.extract_strided_slice %148 {offsets = [0, 256], sizes = [2, 128], strides = [1, 1]} : vector<2x384xf32> to vector<2x128xf32>
    %161 = arith.mulf %157, %160 : vector<2x128xf32>
    %162 = arith.addf %159, %161 : vector<2x128xf32>
    %163 = math.tanh %162 : vector<2x128xf32>
    %cst_39 = arith.constant 1.000000e+00 : f32
    %164 = vector.broadcast %cst_39 : f32 to vector<2x128xf32>
    %165 = arith.subf %164, %158 : vector<2x128xf32>
    %166 = arith.mulf %165, %163 : vector<2x128xf32>
    %167 = arith.mulf %158, %143 : vector<2x128xf32>
    %168 = arith.addf %166, %167 : vector<2x128xf32>
    %169 = vector.extract_strided_slice %41 {offsets = [5, 0, 0], sizes = [1, 2, 384], strides = [1, 1, 1]} : vector<8x2x384xf32> to vector<1x2x384xf32>
    %170 = vector.shape_cast %169 : vector<1x2x384xf32> to vector<2x384xf32>
    %cst_40 = arith.constant dense<0.000000e+00> : vector<2x384xf32>
    %171 = tpu.matmul %168, %42, %cst_40 {dimension_numbers = #tpu.dot_dimension_numbers<[1], [0], [0], [1], [0, 0, 1, 1], [], []>} : vector<2x128xf32>, vector<128x384xf32>, vector<2x384xf32> -> vector<2x384xf32>
    %172 = vector.broadcast %36 : vector<1x384xf32> to vector<2x384xf32>
    %173 = arith.addf %171, %172 : vector<2x384xf32>
    %174 = vector.extract_strided_slice %170 {offsets = [0, 0], sizes = [2, 256], strides = [1, 1]} : vector<2x384xf32> to vector<2x256xf32>
    %175 = vector.extract_strided_slice %173 {offsets = [0, 0], sizes = [2, 256], strides = [1, 1]} : vector<2x384xf32> to vector<2x256xf32>
    %176 = arith.addf %174, %175 : vector<2x256xf32>
    %177 = arith.negf %176 : vector<2x256xf32>
    %178 = math.exp %177 : vector<2x256xf32>
    %cst_41 = arith.constant 1.000000e+00 : f32
    %179 = vector.broadcast %cst_41 : f32 to vector<2x256xf32>
    %180 = arith.addf %179, %178 : vector<2x256xf32>
    %181 = arith.divf %179, %180 : vector<2x256xf32>
    %182 = vector.extract_strided_slice %181 {offsets = [0, 0], sizes = [2, 128], strides = [1, 1]} : vector<2x256xf32> to vector<2x128xf32>
    %183 = vector.extract_strided_slice %181 {offsets = [0, 128], sizes = [2, 128], strides = [1, 1]} : vector<2x256xf32> to vector<2x128xf32>
    %184 = vector.extract_strided_slice %170 {offsets = [0, 256], sizes = [2, 128], strides = [1, 1]} : vector<2x384xf32> to vector<2x128xf32>
    %185 = vector.extract_strided_slice %173 {offsets = [0, 256], sizes = [2, 128], strides = [1, 1]} : vector<2x384xf32> to vector<2x128xf32>
    %186 = arith.mulf %182, %185 : vector<2x128xf32>
    %187 = arith.addf %184, %186 : vector<2x128xf32>
    %188 = math.tanh %187 : vector<2x128xf32>
    %cst_42 = arith.constant 1.000000e+00 : f32
    %189 = vector.broadcast %cst_42 : f32 to vector<2x128xf32>
    %190 = arith.subf %189, %183 : vector<2x128xf32>
    %191 = arith.mulf %190, %188 : vector<2x128xf32>
    %192 = arith.mulf %183, %168 : vector<2x128xf32>
    %193 = arith.addf %191, %192 : vector<2x128xf32>
    %194 = vector.extract_strided_slice %41 {offsets = [6, 0, 0], sizes = [1, 2, 384], strides = [1, 1, 1]} : vector<8x2x384xf32> to vector<1x2x384xf32>
    %195 = vector.shape_cast %194 : vector<1x2x384xf32> to vector<2x384xf32>
    %cst_43 = arith.constant dense<0.000000e+00> : vector<2x384xf32>
    %196 = tpu.matmul %193, %42, %cst_43 {dimension_numbers = #tpu.dot_dimension_numbers<[1], [0], [0], [1], [0, 0, 1, 1], [], []>} : vector<2x128xf32>, vector<128x384xf32>, vector<2x384xf32> -> vector<2x384xf32>
    %197 = vector.broadcast %36 : vector<1x384xf32> to vector<2x384xf32>
    %198 = arith.addf %196, %197 : vector<2x384xf32>
    %199 = vector.extract_strided_slice %195 {offsets = [0, 0], sizes = [2, 256], strides = [1, 1]} : vector<2x384xf32> to vector<2x256xf32>
    %200 = vector.extract_strided_slice %198 {offsets = [0, 0], sizes = [2, 256], strides = [1, 1]} : vector<2x384xf32> to vector<2x256xf32>
    %201 = arith.addf %199, %200 : vector<2x256xf32>
    %202 = arith.negf %201 : vector<2x256xf32>
    %203 = math.exp %202 : vector<2x256xf32>
    %cst_44 = arith.constant 1.000000e+00 : f32
    %204 = vector.broadcast %cst_44 : f32 to vector<2x256xf32>
    %205 = arith.addf %204, %203 : vector<2x256xf32>
    %206 = arith.divf %204, %205 : vector<2x256xf32>
    %207 = vector.extract_strided_slice %206 {offsets = [0, 0], sizes = [2, 128], strides = [1, 1]} : vector<2x256xf32> to vector<2x128xf32>
    %208 = vector.extract_strided_slice %206 {offsets = [0, 128], sizes = [2, 128], strides = [1, 1]} : vector<2x256xf32> to vector<2x128xf32>
    %209 = vector.extract_strided_slice %195 {offsets = [0, 256], sizes = [2, 128], strides = [1, 1]} : vector<2x384xf32> to vector<2x128xf32>
    %210 = vector.extract_strided_slice %198 {offsets = [0, 256], sizes = [2, 128], strides = [1, 1]} : vector<2x384xf32> to vector<2x128xf32>
    %211 = arith.mulf %207, %210 : vector<2x128xf32>
    %212 = arith.addf %209, %211 : vector<2x128xf32>
    %213 = math.tanh %212 : vector<2x128xf32>
    %cst_45 = arith.constant 1.000000e+00 : f32
    %214 = vector.broadcast %cst_45 : f32 to vector<2x128xf32>
    %215 = arith.subf %214, %208 : vector<2x128xf32>
    %216 = arith.mulf %215, %213 : vector<2x128xf32>
    %217 = arith.mulf %208, %193 : vector<2x128xf32>
    %218 = arith.addf %216, %217 : vector<2x128xf32>
    %219 = vector.extract_strided_slice %41 {offsets = [7, 0, 0], sizes = [1, 2, 384], strides = [1, 1, 1]} : vector<8x2x384xf32> to vector<1x2x384xf32>
    %220 = vector.shape_cast %219 : vector<1x2x384xf32> to vector<2x384xf32>
    %cst_46 = arith.constant dense<0.000000e+00> : vector<2x384xf32>
    %221 = tpu.matmul %218, %42, %cst_46 {dimension_numbers = #tpu.dot_dimension_numbers<[1], [0], [0], [1], [0, 0, 1, 1], [], []>} : vector<2x128xf32>, vector<128x384xf32>, vector<2x384xf32> -> vector<2x384xf32>
    %222 = vector.broadcast %36 : vector<1x384xf32> to vector<2x384xf32>
    %223 = arith.addf %221, %222 : vector<2x384xf32>
    %224 = vector.extract_strided_slice %220 {offsets = [0, 0], sizes = [2, 256], strides = [1, 1]} : vector<2x384xf32> to vector<2x256xf32>
    %225 = vector.extract_strided_slice %223 {offsets = [0, 0], sizes = [2, 256], strides = [1, 1]} : vector<2x384xf32> to vector<2x256xf32>
    %226 = arith.addf %224, %225 : vector<2x256xf32>
    %227 = arith.negf %226 : vector<2x256xf32>
    %228 = math.exp %227 : vector<2x256xf32>
    %cst_47 = arith.constant 1.000000e+00 : f32
    %229 = vector.broadcast %cst_47 : f32 to vector<2x256xf32>
    %230 = arith.addf %229, %228 : vector<2x256xf32>
    %231 = arith.divf %229, %230 : vector<2x256xf32>
    %232 = vector.extract_strided_slice %231 {offsets = [0, 0], sizes = [2, 128], strides = [1, 1]} : vector<2x256xf32> to vector<2x128xf32>
    %233 = vector.extract_strided_slice %231 {offsets = [0, 128], sizes = [2, 128], strides = [1, 1]} : vector<2x256xf32> to vector<2x128xf32>
    %234 = vector.extract_strided_slice %220 {offsets = [0, 256], sizes = [2, 128], strides = [1, 1]} : vector<2x384xf32> to vector<2x128xf32>
    %235 = vector.extract_strided_slice %223 {offsets = [0, 256], sizes = [2, 128], strides = [1, 1]} : vector<2x384xf32> to vector<2x128xf32>
    %236 = arith.mulf %232, %235 : vector<2x128xf32>
    %237 = arith.addf %234, %236 : vector<2x128xf32>
    %238 = math.tanh %237 : vector<2x128xf32>
    %cst_48 = arith.constant 1.000000e+00 : f32
    %239 = vector.broadcast %cst_48 : f32 to vector<2x128xf32>
    %240 = arith.subf %239, %233 : vector<2x128xf32>
    %241 = arith.mulf %240, %238 : vector<2x128xf32>
    %242 = arith.mulf %233, %218 : vector<2x128xf32>
    %243 = arith.addf %241, %242 : vector<2x128xf32>
    %c0_49 = arith.constant 0 : index
    %c0_50 = arith.constant 0 : index
    %244 = vector.load %arg6[%c0_49, %c0_50] : memref<128x5xf32, #tpu.memory_space<vmem>>, vector<128x5xf32>
    %cst_51 = arith.constant dense<0.000000e+00> : vector<2x5xf32>
    %245 = tpu.matmul %243, %244, %cst_51 {dimension_numbers = #tpu.dot_dimension_numbers<[1], [0], [0], [1], [0, 0, 1, 1], [], []>} : vector<2x128xf32>, vector<128x5xf32>, vector<2x5xf32> -> vector<2x5xf32>
    %c0_52 = arith.constant 0 : index
    %c0_53 = arith.constant 0 : index
    %246 = vector.load %arg7[%c0_52, %c0_53] : memref<1x5xf32, #tpu.memory_space<vmem>>, vector<1x5xf32>
    %247 = vector.broadcast %246 : vector<1x5xf32> to vector<2x5xf32>
    %248 = arith.addf %245, %247 : vector<2x5xf32>
    %c0_54 = arith.constant 0 : index
    %c0_55 = arith.constant 0 : index
    %249 = vector.load %arg8[%c0_54, %c0_55] : memref<2x5xf32, #tpu.memory_space<vmem>>, vector<2x5xf32>
    tpu.vector_store %arg8[%c0_54, %c0_55], %248 {strides = array<i32>} : memref<2x5xf32, #tpu.memory_space<vmem>>, vector<2x5xf32>,
    return
  }
}

</mosaic_0001>

<llo_original>
// kernel: tpu_custom_call.1
$region0: #{tpu_custom_call.1}
  #allocation0 [shape = 'u32[]', space=smem, size = 0x4, offset = 0x4, fixed_abs, tag = 'smem constant byte address 0x4 - core index']
  #allocation1 [shape = 'u32[72,128]{1,0:T(1,128)}', space=vmem, size = 0x9000, scoped, tag = 'internal scratch']
  %s0 = inlined_call_operand.vmem [shape: f32[8,2,16], index: 0, kind: input, shape index: {}]
  %s1 = inlined_call_operand.vmem [shape: f32[16,32], index: 1, kind: input, shape index: {}]
  %s2 = inlined_call_operand.vmem [shape: f32[3,32], index: 2, kind: input, shape index: {}]
  %s3 = inlined_call_operand.vmem [shape: f32[32,384], index: 3, kind: input, shape index: {}]
  %s4 = inlined_call_operand.hbm [shape: f32[128,384], index: 4, kind: input, shape index: {}]
  %s5 = inlined_call_operand.vmem [shape: f32[2,384], index: 5, kind: input, shape index: {}]
  %s6 = inlined_call_operand.vmem [shape: f32[128,5], index: 6, kind: input, shape index: {}]
  %s7 = inlined_call_operand.vmem [shape: f32[1,5], index: 7, kind: input, shape index: {}]
  %s8 = inlined_call_operand.hbm [shape: f32[2,5], index: 8, kind: output, shape index: {}]
  %s9 = sld [smem:[#allocation0]]
  $region46: #{tpu_custom_call.1} parent=0
    _
  %s11 = ssub.s32 1, %s9
  %s12 = scalar_select 0, %s11, %s9
  $region1: #{tpu_custom_call.1} parent=0
    #allocation2 [shape = 'u8[196608]{0}', space=vmem, size = 0x30000, scoped, tag = 'input window, operand 4, single buffered']
    #allocation3 [shape = 's32[1]{0}', space=sflag, size = 0x4, scoped, tag = 'scoped memory for tpu_custom_call.1']
    #allocation4 [shape = 's32[1]{0}', space=sflag, size = 0x4, scoped, tag = 'scoped memory for tpu_custom_call.1']
    #allocation5 [shape = 'u8[1024]{0}', space=vmem, size = 0x400, scoped, tag = 'output window, operand 0, single buffered']
    %13 = vsyncpa [#allocation3], 0
    %14 = vsyncpa [#allocation4], 0
    // Predicated region
    $region2: #{tpu_custom_call.1} parent=1 // pred_check
      _
    $region3: #{tpu_custom_call.1} parent=1 // pred_check_branch
      %16 = sbr.rel (0) target = $region5
    $region4: #{tpu_custom_call.1} parent=1 // pred_region
      _
    $region5: #{tpu_custom_call.1} parent=1 // pred_fallthru
      _
    // Predicated region
    $region6: #{tpu_custom_call.1} parent=1 // pred_check
      _
    $region7: #{tpu_custom_call.1} parent=1 // pred_check_branch
      %18 = sbr.rel (0) target = $region9
    $region8: #{tpu_custom_call.1} parent=1 // pred_region
      _
    $region9: #{tpu_custom_call.1} parent=1 // pred_fallthru
      _
    // Predicated region
    $region10: #{tpu_custom_call.1} parent=1 // pred_check
      _
    $region11: #{tpu_custom_call.1} parent=1 // pred_check_branch
      %20 = sbr.rel (0) target = $region13
    $region12: #{tpu_custom_call.1} parent=1 // pred_region
      _
    $region13: #{tpu_custom_call.1} parent=1 // pred_fallthru
      _
    // Predicated region
    $region14: #{tpu_custom_call.1} parent=1 // pred_check
      _
    $region15: #{tpu_custom_call.1} parent=1 // pred_check_branch
      %22 = sbr.rel (0) target = $region17
    $region16: #{tpu_custom_call.1} parent=1 // pred_region
      _
    $region17: #{tpu_custom_call.1} parent=1 // pred_fallthru
      _
    // Predicated region
    $region18: #{tpu_custom_call.1} parent=1 // pred_check
      _
    $region19: #{tpu_custom_call.1} parent=1 // pred_check_branch
      %24 = sbr.rel (0) target = $region21
    $region20: #{tpu_custom_call.1} parent=1 // pred_region
      %26 = vsyncadd [#allocation3], 0
      %s27 = sshll.u32 %s4, 4
      %s28 = int_to_ptr.hbm [resolvable:$true] %s27
      %s29 = sshll.u32 [#allocation2], 4
      %s30 = int_to_ptr.vmem [resolvable:$true] %s29
      %35 = dma.hbm_to_vmem [thread:$0]  %s28, 6144, %s30, [#allocation3], 384, 384, 24
    $region21: #{tpu_custom_call.1} parent=1 // pred_fallthru
      _
    // Predicated region
    $region22: #{tpu_custom_call.1} parent=1 // pred_check
      _
    $region23: #{tpu_custom_call.1} parent=1 // pred_check_branch
      %37 = sbr.rel (0) target = $region25
    $region24: #{tpu_custom_call.1} parent=1 // pred_region
      _
    $region25: #{tpu_custom_call.1} parent=1 // pred_fallthru
      _
    // Predicated region
    $region26: #{tpu_custom_call.1} parent=1 // pred_check
      _
    $region27: #{tpu_custom_call.1} parent=1 // pred_check_branch
      %39 = sbr.rel (0) target = $region29
    $region28: #{tpu_custom_call.1} parent=1 // pred_region
      _
    $region29: #{tpu_custom_call.1} parent=1 // pred_fallthru
      _
    // Predicated region
    $region30: #{tpu_custom_call.1} parent=1 // pred_check
      _
    $region31: #{tpu_custom_call.1} parent=1 // pred_check_branch
      %41 = sbr.rel (0) target = $region33
    $region32: #{tpu_custom_call.1} parent=1 // pred_region
      _
    $region33: #{tpu_custom_call.1} parent=1 // pred_fallthru
      _
    // Predicated region
    $region34: #{tpu_custom_call.1} parent=1 // pred_check
      _
    $region35: #{tpu_custom_call.1} parent=1 // pred_check_branch
      %43 = sbr.rel (0) target = $region37
    $region36: #{tpu_custom_call.1} parent=1 // pred_region
      %45 = dma.done [#allocation3], 6144
    $region37: #{tpu_custom_call.1} parent=1 // pred_fallthru
      _
    %v46 = vld [vmem:[%s0] sm:$0x3]
    %v47 = vld [vmem:[%s0 + $0x2] sm:$0x3]
    %v48 = vld [vmem:[%s0 + $0x4] sm:$0x3]
    %v49 = vld [vmem:[%s0 + $0x6] sm:$0x3]
    %v50 = vld [vmem:[%s0 + $0x8] sm:$0x3]
    %v51 = vld [vmem:[%s0 + $0xa] sm:$0x3]
    %v52 = vld [vmem:[%s0 + $0xc] sm:$0x3]
    %v53 = vld [vmem:[%s0 + $0xe] sm:$0x3]
    %v54 = vld [vmem:[%s2] sm:$0x1]
    %v55 = vld [vmem:[%s2 + $0x1] sm:$0x1]
    %v56 = vld [vmem:[%s2 + $0x2] sm:$0x1]
    %v57 = vld [vmem:[%s1] sm:$0xff]
    %v58 = vld [vmem:[%s1 + $0x8] sm:$0xff]
    %v59 = vperm.slane %v54, 0
    %68 = vst [vmem:[#allocation1] ss:$4 sm:$0xff] %v46
    %s69 = scalar_lea.vmem [#allocation1], 1
    %70 = vst [vmem:[%s69] ss:$4 sm:$0xff] %v47
    %s71 = scalar_lea.vmem [#allocation1], 2
    %72 = vst [vmem:[%s71] ss:$4 sm:$0xff] %v48
    %s73 = scalar_lea.vmem [#allocation1], 3
    %74 = vst [vmem:[%s73] ss:$4 sm:$0xff] %v49
    %s75 = scalar_lea.vmem [#allocation1], 32
    %76 = vst [vmem:[%s75] ss:$4 sm:$0xff] %v50
    %s77 = scalar_lea.vmem [#allocation1], 33
    %78 = vst [vmem:[%s77] ss:$4 sm:$0xff] %v51
    %s79 = scalar_lea.vmem [#allocation1], 34
    %80 = vst [vmem:[%s79] ss:$4 sm:$0xff] %v52
    %s81 = scalar_lea.vmem [#allocation1], 35
    %82 = vst [vmem:[%s81] ss:$4 sm:$0xff] %v53
    %v83 = vld.sshfl [vmem:[#allocation1] sm:$0xff pattern:$0x73625140]
    %v84 = vld.sshfl [vmem:[#allocation1 + $0x20] sm:$0xff pattern:$0x73625140]
    %vm85 = vcmask 130048
    %v86 = vsel %vm85, %v83, 0
    %v88 = vsel %vm85, %v84, 0
    %90 = vmatpush.msra.mxu0 0.0
    %91 = vmatpush.msra.mxu0 0.0
    %92 = vmatpush.msra.mxu0 0.0
    %93 = vmatpush.msra.mxu0 0.0
    %94 = vmatpush.msra.mxu0 0.0
    %95 = vmatpush.msra.mxu0 0.0
    %96 = vmatpush.msra.mxu0 0.0
    %97 = vmatpush.msra.mxu0 0.0
    %98 = vmatpush.msra.mxu0 0.0
    %99 = vmatpush.msra.mxu0 0.0
    %100 = vmatpush.msra.mxu0 0.0
    %101 = vmatpush.msra.mxu0 0.0
    %102 = vmatpush.msra.mxu0 0.0
    %103 = vmatpush.msra.mxu0 0.0
    %104 = vmatpush.msra.mxu0 %v58
    %105 = vmatpush.msra.mxu0 %v57
    %106 = vmatmul.f32.gmra.mxu0 %v86
    %v107 = vpop.f32.mrf.mxu0
    %v108 = vadd.f32 %v59, %v107
    %109 = vmatmul.f32.gmra.mxu0 %v88
    %v110 = vpop.f32.mrf.mxu0
    %v111 = vadd.f32 %v59, %v110
    %112 = vdwg.mxu0
    %v113 = vmax.f32 %v108, 0.0
    %v114 = vmax.f32 %v111, 0.0
    %vm115 = vcmask 261120
    %v116 = vsel %vm115, %v113, 0.0
    %117 = vadd.xlane.f32.xlu0 %v116
    %v118 = vpop.xlane.xlu0 %117
    %v119 = vsel %vm115, %v114, 0.0
    %120 = vadd.xlane.f32.xlu0 %v119
    %v121 = vpop.xlane.xlu0 %120
    %v122 = vrcp.pop 32.0
    %v123 = vmul.f32 32.0, %v122
    %v124 = vsub.f32 1.0, %v123
    %v125 = vmul.f32 %v122, %v124
    %v126 = vadd.f32 %v122, %v125
    %vm127 = vweird.f32 %v122
    %v128 = vsel %vm127, %v122, %v126
    %v129 = vmul.f32 %v118, %v128
    %v130 = vmul.f32 %v121, %v128
    %v131 = vmul.f32 %v113, %v113
    %v132 = vmul.f32 %v114, %v114
    %v133 = vsel %vm115, %v131, 0.0
    %134 = vadd.xlane.f32.xlu0 %v133
    %v135 = vpop.xlane.xlu0 %134
    %v136 = vsel %vm115, %v132, 0.0
    %137 = vadd.xlane.f32.xlu0 %v136
    %v138 = vpop.xlane.xlu0 %137
    %v139 = vmul.f32 %v135, %v128
    %v140 = vmul.f32 %v138, %v128
    %v141 = vmul.f32 %v129, %v129
    %v142 = vmul.f32 %v130, %v130
    %v143 = vsub.f32 %v139, %v141
    %v144 = vsub.f32 %v140, %v142
    %v145 = vmax.f32 %v143, 0.0
    %v146 = vmax.f32 %v144, 0.0
    %v147 = vsub.f32 %v113, %v129
    %v148 = vsub.f32 %v114, %v130
    %v149 = vadd.f32 %v145, 1e-06
    %v150 = vadd.f32 %v146, 1e-06
    %v151 = vrsqrt.pop %v149
    %v152 = vmul.f32 %v151, %v149
    %v153 = vmul.f32 %v152, %v151
    %v154 = vmul.f32 0.5, %v153
    %v155 = vsub.f32 1.5, %v154
    %v156 = vmul.f32 %v151, %v155
    %vm157 = vweird.f32 %v149
    %vm158 = vweird.f32 %v151
    %vm159 = vmor %vm157, %vm158
    %v160 = vsel %vm159, %v151, %v156
    %v161 = vrsqrt.pop %v150
    %v162 = vmul.f32 %v161, %v150
    %v163 = vmul.f32 %v162, %v161
    %v164 = vmul.f32 0.5, %v163
    %v165 = vsub.f32 1.5, %v164
    %v166 = vmul.f32 %v161, %v165
    %vm167 = vweird.f32 %v150
    %vm168 = vweird.f32 %v161
    %vm169 = vmor %vm167, %vm168
    %v170 = vsel %vm169, %v161, %v166
    %v171 = vmul.f32 %v147, %v160
    %v172 = vmul.f32 %v148, %v170
    %v173 = vperm.slane %v55, 0
    %v174 = vmul.f32 %v171, %v173
    %v175 = vmul.f32 %v172, %v173
    %v176 = vperm.slane %v56, 0
    %v177 = vadd.f32 %v174, %v176
    %v178 = vadd.f32 %v175, %v176
    %v179 = vld [vmem:[%s5] ss:$2 sm:$0x7]
    %s180 = scalar_lea.vmem %s5, 1
    %v181 = vld [vmem:[%s180] ss:$2 sm:$0x7]
    %v182 = vld [vmem:[%s3] sm:$0xff]
    %v183 = vld [vmem:[%s3 + $0x8] sm:$0xff]
    %v184 = vld [vmem:[%s3 + $0x10] sm:$0xff]
    %v185 = vld [vmem:[%s3 + $0x18] sm:$0xff]
    %v186 = vld [vmem:[%s3 + $0x20] sm:$0xff]
    %v187 = vld [vmem:[%s3 + $0x28] sm:$0xff]
    %v188 = vld [vmem:[%s3 + $0x30] sm:$0xff]
    %v189 = vld [vmem:[%s3 + $0x38] sm:$0xff]
    %v190 = vld [vmem:[%s3 + $0x40] sm:$0xff]
    %v191 = vld [vmem:[%s3 + $0x48] sm:$0xff]
    %v192 = vld [vmem:[%s3 + $0x50] sm:$0xff]
    %v193 = vld [vmem:[%s3 + $0x58] sm:$0xff]
    %v195 = vperm.slane %v179, 0
    %v196 = vperm.slane %v179, 1
    %v197 = vperm.slane %v179, 2
    %v202 = vsel %vm115, %v177, 0
    %v205 = vsel %vm115, %v178, 0
    %207 = vmatpush.msra.mxu0 0.0
    %208 = vmatpush.msra.mxu0 0.0
    %209 = vmatpush.msra.mxu0 0.0
    %210 = vmatpush.msra.mxu0 0.0
    %211 = vmatpush.msra.mxu0 0.0
    %212 = vmatpush.msra.mxu0 0.0
    %213 = vmatpush.msra.mxu0 0.0
    %214 = vmatpush.msra.mxu0 0.0
    %215 = vmatpush.msra.mxu0 0.0
    %216 = vmatpush.msra.mxu0 0.0
    %217 = vmatpush.msra.mxu0 0.0
    %218 = vmatpush.msra.mxu0 0.0
    %219 = vmatpush.msra.mxu0 %v191
    %220 = vmatpush.msra.mxu0 %v188
    %221 = vmatpush.msra.mxu0 %v185
    %222 = vmatpush.msra.mxu0 %v182
    %223 = vmatmul.f32.gmra.mxu0 %v202
    %v224 = vpop.f32.mrf.mxu0
    %v225 = vadd.f32 %v195, %v224
    %226 = vmatmul.f32.gmra.mxu0 %v205
    %v227 = vpop.f32.mrf.mxu0
    %v228 = vadd.f32 %v195, %v227
    %229 = vdwg.mxu0
    %230 = vmatpush.msra.mxu0 0.0
    %231 = vmatpush.msra.mxu0 0.0
    %232 = vmatpush.msra.mxu0 0.0
    %233 = vmatpush.msra.mxu0 0.0
    %234 = vmatpush.msra.mxu0 0.0
    %235 = vmatpush.msra.mxu0 0.0
    %236 = vmatpush.msra.mxu0 0.0
    %237 = vmatpush.msra.mxu0 0.0
    %238 = vmatpush.msra.mxu0 0.0
    %239 = vmatpush.msra.mxu0 0.0
    %240 = vmatpush.msra.mxu0 0.0
    %241 = vmatpush.msra.mxu0 0.0
    %242 = vmatpush.msra.mxu0 %v192
    %243 = vmatpush.msra.mxu0 %v189
    %244 = vmatpush.msra.mxu0 %v186
    %245 = vmatpush.msra.mxu0 %v183
    %246 = vmatmul.f32.gmra.mxu0 %v202
    %v247 = vpop.f32.mrf.mxu0
    %v248 = vadd.f32 %v196, %v247
    %249 = vmatmul.f32.gmra.mxu0 %v205
    %v250 = vpop.f32.mrf.mxu0
    %v251 = vadd.f32 %v196, %v250
    %252 = vdwg.mxu0
    %253 = vmatpush.msra.mxu0 0.0
    %254 = vmatpush.msra.mxu0 0.0
    %255 = vmatpush.msra.mxu0 0.0
    %256 = vmatpush.msra.mxu0 0.0
    %257 = vmatpush.msra.mxu0 0.0
    %258 = vmatpush.msra.mxu0 0.0
    %259 = vmatpush.msra.mxu0 0.0
    %260 = vmatpush.msra.mxu0 0.0
    %261 = vmatpush.msra.mxu0 0.0
    %262 = vmatpush.msra.mxu0 0.0
    %263 = vmatpush.msra.mxu0 0.0
    %264 = vmatpush.msra.mxu0 0.0
    %265 = vmatpush.msra.mxu0 %v193
    %266 = vmatpush.msra.mxu0 %v190
    %267 = vmatpush.msra.mxu0 %v187
    %268 = vmatpush.msra.mxu0 %v184
    %269 = vmatmul.f32.gmra.mxu0 %v202
    %v270 = vpop.f32.mrf.mxu0
    %v271 = vadd.f32 %v197, %v270
    %272 = vmatmul.f32.gmra.mxu0 %v205
    %v273 = vpop.f32.mrf.mxu0
    %v274 = vadd.f32 %v197, %v273
    %275 = vdwg.mxu0
    %v282 = vrot.slane %v248, 6
    %v283 = vrot.slane %v271, 4
    %v284 = vrot.slane %v251, 6
    %v285 = vrot.slane %v274, 4
    %vm286 = vcmask 1041408
    %v287 = vsel %vm286, %v225, %v282
    %vm288 = vcmask 1043456
    %v289 = vsel %vm288, %v287, %v283
    %vm290 = vcmask 1043458
    %v291 = vsel %vm290, %v225, %v282
    %vm292 = vcmask 1045506
    %v293 = vsel %vm292, %v291, %v283
    %v294 = vrot.slane %v293, 2
    %vm295 = vcmask 1045508
    %v296 = vsel %vm295, %v225, %v282
    %v297 = vsel %vm288, %v283, %v296
    %v298 = vrot.slane %v297, 4
    %vm299 = vcmask 1045504
    %v300 = vsel %vm299, %v282, %v225
    %v301 = vsel %vm292, %v283, %v300
    %v302 = vrot.slane %v301, 6
    %v303 = vsel %vm286, %v228, %v284
    %v304 = vsel %vm288, %v303, %v285
    %v305 = vsel %vm290, %v228, %v284
    %v306 = vsel %vm292, %v305, %v285
    %v307 = vrot.slane %v306, 2
    %v308 = vsel %vm295, %v228, %v284
    %v309 = vsel %vm288, %v285, %v308
    %v310 = vrot.slane %v309, 4
    %v311 = vsel %vm299, %v284, %v228
    %v312 = vsel %vm292, %v285, %v311
    %v313 = vrot.slane %v312, 6
    %v322 = vld [vmem:[#allocation2] sm:$0xff]
    %v323 = vld [vmem:[#allocation2 + $0x8] sm:$0xff]
    %v324 = vld [vmem:[#allocation2 + $0x10] sm:$0xff]
    %v325 = vld [vmem:[#allocation2 + $0x18] sm:$0xff]
    %v326 = vld [vmem:[#allocation2 + $0x20] sm:$0xff]
    %v327 = vld [vmem:[#allocation2 + $0x28] sm:$0xff]
    %v328 = vld [vmem:[#allocation2 + $0x30] sm:$0xff]
    %v329 = vld [vmem:[#allocation2 + $0x38] sm:$0xff]
    %v330 = vld [vmem:[#allocation2 + $0x40] sm:$0xff]
    %v331 = vld [vmem:[#allocation2 + $0x48] sm:$0xff]
    %v332 = vld [vmem:[#allocation2 + $0x50] sm:$0xff]
    %v333 = vld [vmem:[#allocation2 + $0x58] sm:$0xff]
    %v334 = vld [vmem:[#allocation2 + $0x60] sm:$0xff]
    %v335 = vld [vmem:[#allocation2 + $0x68] sm:$0xff]
    %v336 = vld [vmem:[#allocation2 + $0x70] sm:$0xff]
    %v337 = vld [vmem:[#allocation2 + $0x78] sm:$0xff]
    %v338 = vld [vmem:[#allocation2 + $0x80] sm:$0xff]
    %v339 = vld [vmem:[#allocation2 + $0x88] sm:$0xff]
    %v340 = vld [vmem:[#allocation2 + $0x90] sm:$0xff]
    %v341 = vld [vmem:[#allocation2 + $0x98] sm:$0xff]
    %v342 = vld [vmem:[#allocation2 + $0xa0] sm:$0xff]
    %v343 = vld [vmem:[#allocation2 + $0xa8] sm:$0xff]
    %v344 = vld [vmem:[#allocation2 + $0xb0] sm:$0xff]
    %v345 = vld [vmem:[#allocation2 + $0xb8] sm:$0xff]
    %v346 = vld [vmem:[#allocation2 + $0xc0] sm:$0xff]
    %v347 = vld [vmem:[#allocation2 + $0xc8] sm:$0xff]
    %v348 = vld [vmem:[#allocation2 + $0xd0] sm:$0xff]
    %v349 = vld [vmem:[#allocation2 + $0xd8] sm:$0xff]
    %v350 = vld [vmem:[#allocation2 + $0xe0] sm:$0xff]
    %v351 = vld [vmem:[#allocation2 + $0xe8] sm:$0xff]
    %v352 = vld [vmem:[#allocation2 + $0xf0] sm:$0xff]
    %v353 = vld [vmem:[#allocation2 + $0xf8] sm:$0xff]
    %v354 = vld [vmem:[#allocation2 + $0x100] sm:$0xff]
    %v355 = vld [vmem:[#allocation2 + $0x108] sm:$0xff]
    %v356 = vld [vmem:[#allocation2 + $0x110] sm:$0xff]
    %v357 = vld [vmem:[#allocation2 + $0x118] sm:$0xff]
    %v358 = vld [vmem:[#allocation2 + $0x120] sm:$0xff]
    %v359 = vld [vmem:[#allocation2 + $0x128] sm:$0xff]
    %v360 = vld [vmem:[#allocation2 + $0x130] sm:$0xff]
    %v361 = vld [vmem:[#allocation2 + $0x138] sm:$0xff]
    %v362 = vld [vmem:[#allocation2 + $0x140] sm:$0xff]
    %v363 = vld [vmem:[#allocation2 + $0x148] sm:$0xff]
    %v364 = vld [vmem:[#allocation2 + $0x150] sm:$0xff]
    %v365 = vld [vmem:[#allocation2 + $0x158] sm:$0xff]
    %v366 = vld [vmem:[#allocation2 + $0x160] sm:$0xff]
    %v367 = vld [vmem:[#allocation2 + $0x168] sm:$0xff]
    %v368 = vld [vmem:[#allocation2 + $0x170] sm:$0xff]
    %v369 = vld [vmem:[#allocation2 + $0x178] sm:$0xff]
    %v371 = vperm.slane %v181, 0
    %v372 = vperm.slane %v181, 1
    %v373 = vperm.slane %v181, 2
    %377 = vmatpush.msra.mxu0 %v367
    %378 = vmatpush.msra.mxu0 %v364
    %379 = vmatpush.msra.mxu0 %v361
    %380 = vmatpush.msra.mxu0 %v358
    %381 = vmatpush.msra.mxu0 %v355
    %382 = vmatpush.msra.mxu0 %v352
    %383 = vmatpush.msra.mxu0 %v349
    %384 = vmatpush.msra.mxu0 %v346
    %385 = vmatpush.msra.mxu0 %v343
    %386 = vmatpush.msra.mxu0 %v340
    %387 = vmatpush.msra.mxu0 %v337
    %388 = vmatpush.msra.mxu0 %v334
    %389 = vmatpush.msra.mxu0 %v331
    %390 = vmatpush.msra.mxu0 %v328
    %391 = vmatpush.msra.mxu0 %v325
    %392 = vmatpush.msra.mxu0 %v322
    %393 = vmatmul.f32.gmra.mxu0 0.0
    %v394 = vpop.f32.mrf.mxu0
    %v395 = vadd.f32 %v371, %v394
    %396 = vdwg.mxu0
    %397 = vmatpush.msra.mxu0 %v368
    %398 = vmatpush.msra.mxu0 %v365
    %399 = vmatpush.msra.mxu0 %v362
    %400 = vmatpush.msra.mxu0 %v359
    %401 = vmatpush.msra.mxu0 %v356
    %402 = vmatpush.msra.mxu0 %v353
    %403 = vmatpush.msra.mxu0 %v350
    %404 = vmatpush.msra.mxu0 %v347
    %405 = vmatpush.msra.mxu0 %v344
    %406 = vmatpush.msra.mxu0 %v341
    %407 = vmatpush.msra.mxu0 %v338
    %408 = vmatpush.msra.mxu0 %v335
    %409 = vmatpush.msra.mxu0 %v332
    %410 = vmatpush.msra.mxu0 %v329
    %411 = vmatpush.msra.mxu0 %v326
    %412 = vmatpush.msra.mxu0 %v323
    %413 = vmatmul.f32.gmra.mxu0 0.0
    %v414 = vpop.f32.mrf.mxu0
    %v415 = vadd.f32 %v372, %v414
    %416 = vdwg.mxu0
    %417 = vmatpush.msra.mxu0 %v369
    %418 = vmatpush.msra.mxu0 %v366
    %419 = vmatpush.msra.mxu0 %v363
    %420 = vmatpush.msra.mxu0 %v360
    %421 = vmatpush.msra.mxu0 %v357
    %422 = vmatpush.msra.mxu0 %v354
    %423 = vmatpush.msra.mxu0 %v351
    %424 = vmatpush.msra.mxu0 %v348
    %425 = vmatpush.msra.mxu0 %v345
    %426 = vmatpush.msra.mxu0 %v342
    %427 = vmatpush.msra.mxu0 %v339
    %428 = vmatpush.msra.mxu0 %v336
    %429 = vmatpush.msra.mxu0 %v333
    %430 = vmatpush.msra.mxu0 %v330
    %431 = vmatpush.msra.mxu0 %v327
    %432 = vmatpush.msra.mxu0 %v324
    %433 = vmatmul.f32.gmra.mxu0 0.0
    %v434 = vpop.f32.mrf.mxu0
    %v435 = vadd.f32 %v373, %v434
    %436 = vdwg.mxu0
    %v439 = vrot.slane %v415, 6
    %v440 = vsel %vm286, %v395, %v439
    %v442 = vadd.f32 %v289, %v440
    %v443 = vxor.u32 %v442, 2147483648
    %v444 = vmul.f32 %v443, 1.442695
    %v445 = vpow.pop %v444
    %v446 = vadd.f32 %v445, 1.0
    %v447 = vrcp.pop %v446
    %v448 = vmul.f32 %v446, %v447
    %v449 = vsub.f32 1.0, %v448
    %v450 = vmul.f32 %v447, %v449
    %v451 = vadd.f32 %v447, %v450
    %vm452 = vweird.f32 %v446
    %vm453 = vweird.f32 %v447
    %vm454 = vmor %vm452, %vm453
    %v455 = vsel %vm454, %v447, %v451
    %v456 = vand.u32 2147483647, %v446
    %vm457 = vcmp.eq.f32.partialorder %v456, 8.507059e+37
    %v458 = vand.u32 %v446, 2147483648
    %v459 = vor.u32 1.1754944e-38, %v458
    %v460 = vsel %vm457, %v459, %v455
    %v461 = vmul.f32 1.0, %v460
    %v462 = vmul.f32 %v461, %v435
    %v463 = vrot.slane %v289, 4
    %v465 = vadd.f32 %v463, %v462
    %v466 = vtanh.pop %v465
    %v468 = vrot.slane %v461, 2
    %v470 = vsub.f32 1.0, %v468
    %v471 = vmul.f32 %v470, %v466
    %v472 = vmul.f32 %v468, 0.0
    %v473 = vadd.f32 %v471, %v472
    %474 = vmatpush.msra.mxu0 %v367
    %475 = vmatpush.msra.mxu0 %v364
    %476 = vmatpush.msra.mxu0 %v361
    %477 = vmatpush.msra.mxu0 %v358
    %478 = vmatpush.msra.mxu0 %v355
    %479 = vmatpush.msra.mxu0 %v352
    %480 = vmatpush.msra.mxu0 %v349
    %481 = vmatpush.msra.mxu0 %v346
    %482 = vmatpush.msra.mxu0 %v343
    %483 = vmatpush.msra.mxu0 %v340
    %484 = vmatpush.msra.mxu0 %v337
    %485 = vmatpush.msra.mxu0 %v334
    %486 = vmatpush.msra.mxu0 %v331
    %487 = vmatpush.msra.mxu0 %v328
    %488 = vmatpush.msra.mxu0 %v325
    %489 = vmatpush.msra.mxu0 %v322
    %490 = vmatmul.f32.gmra.mxu0 %v473
    %v491 = vpop.f32.mrf.mxu0
    %v492 = vadd.f32 %v371, %v491
    %493 = vdwg.mxu0
    %494 = vmatpush.msra.mxu0 %v368
    %495 = vmatpush.msra.mxu0 %v365
    %496 = vmatpush.msra.mxu0 %v362
    %497 = vmatpush.msra.mxu0 %v359
    %498 = vmatpush.msra.mxu0 %v356
    %499 = vmatpush.msra.mxu0 %v353
    %500 = vmatpush.msra.mxu0 %v350
    %501 = vmatpush.msra.mxu0 %v347
    %502 = vmatpush.msra.mxu0 %v344
    %503 = vmatpush.msra.mxu0 %v341
    %504 = vmatpush.msra.mxu0 %v338
    %505 = vmatpush.msra.mxu0 %v335
    %506 = vmatpush.msra.mxu0 %v332
    %507 = vmatpush.msra.mxu0 %v329
    %508 = vmatpush.msra.mxu0 %v326
    %509 = vmatpush.msra.mxu0 %v323
    %510 = vmatmul.f32.gmra.mxu0 %v473
    %v511 = vpop.f32.mrf.mxu0
    %v512 = vadd.f32 %v372, %v511
    %513 = vdwg.mxu0
    %514 = vmatpush.msra.mxu0 %v369
    %515 = vmatpush.msra.mxu0 %v366
    %516 = vmatpush.msra.mxu0 %v363
    %517 = vmatpush.msra.mxu0 %v360
    %518 = vmatpush.msra.mxu0 %v357
    %519 = vmatpush.msra.mxu0 %v354
    %520 = vmatpush.msra.mxu0 %v351
    %521 = vmatpush.msra.mxu0 %v348
    %522 = vmatpush.msra.mxu0 %v345
    %523 = vmatpush.msra.mxu0 %v342
    %524 = vmatpush.msra.mxu0 %v339
    %525 = vmatpush.msra.mxu0 %v336
    %526 = vmatpush.msra.mxu0 %v333
    %527 = vmatpush.msra.mxu0 %v330
    %528 = vmatpush.msra.mxu0 %v327
    %529 = vmatpush.msra.mxu0 %v324
    %530 = vmatmul.f32.gmra.mxu0 %v473
    %v531 = vpop.f32.mrf.mxu0
    %v532 = vadd.f32 %v373, %v531
    %533 = vdwg.mxu0
    %v536 = vrot.slane %v512, 6
    %v537 = vsel %vm286, %v492, %v536
    %v539 = vadd.f32 %v294, %v537
    %v540 = vxor.u32 %v539, 2147483648
    %v541 = vmul.f32 %v540, 1.442695
    %v542 = vpow.pop %v541
    %v543 = vadd.f32 %v542, 1.0
    %v544 = vrcp.pop %v543
    %v545 = vmul.f32 %v543, %v544
    %v546 = vsub.f32 1.0, %v545
    %v547 = vmul.f32 %v544, %v546
    %v548 = vadd.f32 %v544, %v547
    %vm549 = vweird.f32 %v543
    %vm550 = vweird.f32 %v544
    %vm551 = vmor %vm549, %vm550
    %v552 = vsel %vm551, %v544, %v548
    %v553 = vand.u32 2147483647, %v543
    %vm554 = vcmp.eq.f32.partialorder %v553, 8.507059e+37
    %v555 = vand.u32 %v543, 2147483648
    %v556 = vor.u32 1.1754944e-38, %v555
    %v557 = vsel %vm554, %v556, %v552
    %v558 = vmul.f32 1.0, %v557
    %v559 = vmul.f32 %v558, %v532
    %v560 = vrot.slane %v294, 4
    %v562 = vadd.f32 %v560, %v559
    %v563 = vtanh.pop %v562
    %v565 = vrot.slane %v558, 2
    %v567 = vsub.f32 1.0, %v565
    %v568 = vmul.f32 %v567, %v563
    %v569 = vmul.f32 %v565, %v473
    %v570 = vadd.f32 %v568, %v569
    %571 = vmatpush.msra.mxu0 %v367
    %572 = vmatpush.msra.mxu0 %v364
    %573 = vmatpush.msra.mxu0 %v361
    %574 = vmatpush.msra.mxu0 %v358
    %575 = vmatpush.msra.mxu0 %v355
    %576 = vmatpush.msra.mxu0 %v352
    %577 = vmatpush.msra.mxu0 %v349
    %578 = vmatpush.msra.mxu0 %v346
    %579 = vmatpush.msra.mxu0 %v343
    %580 = vmatpush.msra.mxu0 %v340
    %581 = vmatpush.msra.mxu0 %v337
    %582 = vmatpush.msra.mxu0 %v334
    %583 = vmatpush.msra.mxu0 %v331
    %584 = vmatpush.msra.mxu0 %v328
    %585 = vmatpush.msra.mxu0 %v325
    %586 = vmatpush.msra.mxu0 %v322
    %587 = vmatmul.f32.gmra.mxu0 %v570
    %v588 = vpop.f32.mrf.mxu0
    %v589 = vadd.f32 %v371, %v588
    %590 = vdwg.mxu0
    %591 = vmatpush.msra.mxu0 %v368
    %592 = vmatpush.msra.mxu0 %v365
    %593 = vmatpush.msra.mxu0 %v362
    %594 = vmatpush.msra.mxu0 %v359
    %595 = vmatpush.msra.mxu0 %v356
    %596 = vmatpush.msra.mxu0 %v353
    %597 = vmatpush.msra.mxu0 %v350
    %598 = vmatpush.msra.mxu0 %v347
    %599 = vmatpush.msra.mxu0 %v344
    %600 = vmatpush.msra.mxu0 %v341
    %601 = vmatpush.msra.mxu0 %v338
    %602 = vmatpush.msra.mxu0 %v335
    %603 = vmatpush.msra.mxu0 %v332
    %604 = vmatpush.msra.mxu0 %v329
    %605 = vmatpush.msra.mxu0 %v326
    %606 = vmatpush.msra.mxu0 %v323
    %607 = vmatmul.f32.gmra.mxu0 %v570
    %v608 = vpop.f32.mrf.mxu0
    %v609 = vadd.f32 %v372, %v608
    %610 = vdwg.mxu0
    %611 = vmatpush.msra.mxu0 %v369
    %612 = vmatpush.msra.mxu0 %v366
    %613 = vmatpush.msra.mxu0 %v363
    %614 = vmatpush.msra.mxu0 %v360
    %615 = vmatpush.msra.mxu0 %v357
    %616 = vmatpush.msra.mxu0 %v354
    %617 = vmatpush.msra.mxu0 %v351
    %618 = vmatpush.msra.mxu0 %v348
    %619 = vmatpush.msra.mxu0 %v345
    %620 = vmatpush.msra.mxu0 %v342
    %621 = vmatpush.msra.mxu0 %v339
    %622 = vmatpush.msra.mxu0 %v336
    %623 = vmatpush.msra.mxu0 %v333
    %624 = vmatpush.msra.mxu0 %v330
    %625 = vmatpush.msra.mxu0 %v327
    %626 = vmatpush.msra.mxu0 %v324
    %627 = vmatmul.f32.gmra.mxu0 %v570
    %v628 = vpop.f32.mrf.mxu0
    %v629 = vadd.f32 %v373, %v628
    %630 = vdwg.mxu0
    %v633 = vrot.slane %v609, 6
    %v634 = vsel %vm286, %v589, %v633
    %v636 = vadd.f32 %v298, %v634
    %v637 = vxor.u32 %v636, 2147483648
    %v638 = vmul.f32 %v637, 1.442695
    %v639 = vpow.pop %v638
    %v640 = vadd.f32 %v639, 1.0
    %v641 = vrcp.pop %v640
    %v642 = vmul.f32 %v640, %v641
    %v643 = vsub.f32 1.0, %v642
    %v644 = vmul.f32 %v641, %v643
    %v645 = vadd.f32 %v641, %v644
    %vm646 = vweird.f32 %v640
    %vm647 = vweird.f32 %v641
    %vm648 = vmor %vm646, %vm647
    %v649 = vsel %vm648, %v641, %v645
    %v650 = vand.u32 2147483647, %v640
    %vm651 = vcmp.eq.f32.partialorder %v650, 8.507059e+37
    %v652 = vand.u32 %v640, 2147483648
    %v653 = vor.u32 1.1754944e-38, %v652
    %v654 = vsel %vm651, %v653, %v649
    %v655 = vmul.f32 1.0, %v654
    %v656 = vmul.f32 %v655, %v629
    %v657 = vrot.slane %v298, 4
    %v659 = vadd.f32 %v657, %v656
    %v660 = vtanh.pop %v659
    %v662 = vrot.slane %v655, 2
    %v664 = vsub.f32 1.0, %v662
    %v665 = vmul.f32 %v664, %v660
    %v666 = vmul.f32 %v662, %v570
    %v667 = vadd.f32 %v665, %v666
    %668 = vmatpush.msra.mxu0 %v367
    %669 = vmatpush.msra.mxu0 %v364
    %670 = vmatpush.msra.mxu0 %v361
    %671 = vmatpush.msra.mxu0 %v358
    %672 = vmatpush.msra.mxu0 %v355
    %673 = vmatpush.msra.mxu0 %v352
    %674 = vmatpush.msra.mxu0 %v349
    %675 = vmatpush.msra.mxu0 %v346
    %676 = vmatpush.msra.mxu0 %v343
    %677 = vmatpush.msra.mxu0 %v340
    %678 = vmatpush.msra.mxu0 %v337
    %679 = vmatpush.msra.mxu0 %v334
    %680 = vmatpush.msra.mxu0 %v331
    %681 = vmatpush.msra.mxu0 %v328
    %682 = vmatpush.msra.mxu0 %v325
    %683 = vmatpush.msra.mxu0 %v322
    %684 = vmatmul.f32.gmra.mxu0 %v667
    %v685 = vpop.f32.mrf.mxu0
    %v686 = vadd.f32 %v371, %v685
    %687 = vdwg.mxu0
    %688 = vmatpush.msra.mxu0 %v368
    %689 = vmatpush.msra.mxu0 %v365
    %690 = vmatpush.msra.mxu0 %v362
    %691 = vmatpush.msra.mxu0 %v359
    %692 = vmatpush.msra.mxu0 %v356
    %693 = vmatpush.msra.mxu0 %v353
    %694 = vmatpush.msra.mxu0 %v350
    %695 = vmatpush.msra.mxu0 %v347
    %696 = vmatpush.msra.mxu0 %v344
    %697 = vmatpush.msra.mxu0 %v341
    %698 = vmatpush.msra.mxu0 %v338
    %699 = vmatpush.msra.mxu0 %v335
    %700 = vmatpush.msra.mxu0 %v332
    %701 = vmatpush.msra.mxu0 %v329
    %702 = vmatpush.msra.mxu0 %v326
    %703 = vmatpush.msra.mxu0 %v323
    %704 = vmatmul.f32.gmra.mxu0 %v667
    %v705 = vpop.f32.mrf.mxu0
    %v706 = vadd.f32 %v372, %v705
    %707 = vdwg.mxu0
    %708 = vmatpush.msra.mxu0 %v369
    %709 = vmatpush.msra.mxu0 %v366
    %710 = vmatpush.msra.mxu0 %v363
    %711 = vmatpush.msra.mxu0 %v360
    %712 = vmatpush.msra.mxu0 %v357
    %713 = vmatpush.msra.mxu0 %v354
    %714 = vmatpush.msra.mxu0 %v351
    %715 = vmatpush.msra.mxu0 %v348
    %716 = vmatpush.msra.mxu0 %v345
    %717 = vmatpush.msra.mxu0 %v342
    %718 = vmatpush.msra.mxu0 %v339
    %719 = vmatpush.msra.mxu0 %v336
    %720 = vmatpush.msra.mxu0 %v333
    %721 = vmatpush.msra.mxu0 %v330
    %722 = vmatpush.msra.mxu0 %v327
    %723 = vmatpush.msra.mxu0 %v324
    %724 = vmatmul.f32.gmra.mxu0 %v667
    %v725 = vpop.f32.mrf.mxu0
    %v726 = vadd.f32 %v373, %v725
    %727 = vdwg.mxu0
    %v730 = vrot.slane %v706, 6
    %v731 = vsel %vm286, %v686, %v730
    %v733 = vadd.f32 %v302, %v731
    %v734 = vxor.u32 %v733, 2147483648
    %v735 = vmul.f32 %v734, 1.442695
    %v736 = vpow.pop %v735
    %v737 = vadd.f32 %v736, 1.0
    %v738 = vrcp.pop %v737
    %v739 = vmul.f32 %v737, %v738
    %v740 = vsub.f32 1.0, %v739
    %v741 = vmul.f32 %v738, %v740
    %v742 = vadd.f32 %v738, %v741
    %vm743 = vweird.f32 %v737
    %vm744 = vweird.f32 %v738
    %vm745 = vmor %vm743, %vm744
    %v746 = vsel %vm745, %v738, %v742
    %v747 = vand.u32 2147483647, %v737
    %vm748 = vcmp.eq.f32.partialorder %v747, 8.507059e+37
    %v749 = vand.u32 %v737, 2147483648
    %v750 = vor.u32 1.1754944e-38, %v749
    %v751 = vsel %vm748, %v750, %v746
    %v752 = vmul.f32 1.0, %v751
    %v753 = vmul.f32 %v752, %v726
    %v754 = vrot.slane %v302, 4
    %v756 = vadd.f32 %v754, %v753
    %v757 = vtanh.pop %v756
    %v759 = vrot.slane %v752, 2
    %v761 = vsub.f32 1.0, %v759
    %v762 = vmul.f32 %v761, %v757
    %v763 = vmul.f32 %v759, %v667
    %v764 = vadd.f32 %v762, %v763
    %765 = vmatpush.msra.mxu0 %v367
    %766 = vmatpush.msra.mxu0 %v364
    %767 = vmatpush.msra.mxu0 %v361
    %768 = vmatpush.msra.mxu0 %v358
    %769 = vmatpush.msra.mxu0 %v355
    %770 = vmatpush.msra.mxu0 %v352
    %771 = vmatpush.msra.mxu0 %v349
    %772 = vmatpush.msra.mxu0 %v346
    %773 = vmatpush.msra.mxu0 %v343
    %774 = vmatpush.msra.mxu0 %v340
    %775 = vmatpush.msra.mxu0 %v337
    %776 = vmatpush.msra.mxu0 %v334
    %777 = vmatpush.msra.mxu0 %v331
    %778 = vmatpush.msra.mxu0 %v328
    %779 = vmatpush.msra.mxu0 %v325
    %780 = vmatpush.msra.mxu0 %v322
    %781 = vmatmul.f32.gmra.mxu0 %v764
    %v782 = vpop.f32.mrf.mxu0
    %v783 = vadd.f32 %v371, %v782
    %784 = vdwg.mxu0
    %785 = vmatpush.msra.mxu0 %v368
    %786 = vmatpush.msra.mxu0 %v365
    %787 = vmatpush.msra.mxu0 %v362
    %788 = vmatpush.msra.mxu0 %v359
    %789 = vmatpush.msra.mxu0 %v356
    %790 = vmatpush.msra.mxu0 %v353
    %791 = vmatpush.msra.mxu0 %v350
    %792 = vmatpush.msra.mxu0 %v347
    %793 = vmatpush.msra.mxu0 %v344
    %794 = vmatpush.msra.mxu0 %v341
    %795 = vmatpush.msra.mxu0 %v338
    %796 = vmatpush.msra.mxu0 %v335
    %797 = vmatpush.msra.mxu0 %v332
    %798 = vmatpush.msra.mxu0 %v329
    %799 = vmatpush.msra.mxu0 %v326
    %800 = vmatpush.msra.mxu0 %v323
    %801 = vmatmul.f32.gmra.mxu0 %v764
    %v802 = vpop.f32.mrf.mxu0
    %v803 = vadd.f32 %v372, %v802
    %804 = vdwg.mxu0
    %805 = vmatpush.msra.mxu0 %v369
    %806 = vmatpush.msra.mxu0 %v366
    %807 = vmatpush.msra.mxu0 %v363
    %808 = vmatpush.msra.mxu0 %v360
    %809 = vmatpush.msra.mxu0 %v357
    %810 = vmatpush.msra.mxu0 %v354
    %811 = vmatpush.msra.mxu0 %v351
    %812 = vmatpush.msra.mxu0 %v348
    %813 = vmatpush.msra.mxu0 %v345
    %814 = vmatpush.msra.mxu0 %v342
    %815 = vmatpush.msra.mxu0 %v339
    %816 = vmatpush.msra.mxu0 %v336
    %817 = vmatpush.msra.mxu0 %v333
    %818 = vmatpush.msra.mxu0 %v330
    %819 = vmatpush.msra.mxu0 %v327
    %820 = vmatpush.msra.mxu0 %v324
    %821 = vmatmul.f32.gmra.mxu0 %v764
    %v822 = vpop.f32.mrf.mxu0
    %v823 = vadd.f32 %v373, %v822
    %824 = vdwg.mxu0
    %v827 = vrot.slane %v803, 6
    %v828 = vsel %vm286, %v783, %v827
    %v830 = vadd.f32 %v304, %v828
    %v831 = vxor.u32 %v830, 2147483648
    %v832 = vmul.f32 %v831, 1.442695
    %v833 = vpow.pop %v832
    %v834 = vadd.f32 %v833, 1.0
    %v835 = vrcp.pop %v834
    %v836 = vmul.f32 %v834, %v835
    %v837 = vsub.f32 1.0, %v836
    %v838 = vmul.f32 %v835, %v837
    %v839 = vadd.f32 %v835, %v838
    %vm840 = vweird.f32 %v834
    %vm841 = vweird.f32 %v835
    %vm842 = vmor %vm840, %vm841
    %v843 = vsel %vm842, %v835, %v839
    %v844 = vand.u32 2147483647, %v834
    %vm845 = vcmp.eq.f32.partialorder %v844, 8.507059e+37
    %v846 = vand.u32 %v834, 2147483648
    %v847 = vor.u32 1.1754944e-38, %v846
    %v848 = vsel %vm845, %v847, %v843
    %v849 = vmul.f32 1.0, %v848
    %v850 = vmul.f32 %v849, %v823
    %v851 = vrot.slane %v304, 4
    %v853 = vadd.f32 %v851, %v850
    %v854 = vtanh.pop %v853
    %v856 = vrot.slane %v849, 2
    %v858 = vsub.f32 1.0, %v856
    %v859 = vmul.f32 %v858, %v854
    %v860 = vmul.f32 %v856, %v764
    %v861 = vadd.f32 %v859, %v860
    %862 = vmatpush.msra.mxu0 %v367
    %863 = vmatpush.msra.mxu0 %v364
    %864 = vmatpush.msra.mxu0 %v361
    %865 = vmatpush.msra.mxu0 %v358
    %866 = vmatpush.msra.mxu0 %v355
    %867 = vmatpush.msra.mxu0 %v352
    %868 = vmatpush.msra.mxu0 %v349
    %869 = vmatpush.msra.mxu0 %v346
    %870 = vmatpush.msra.mxu0 %v343
    %871 = vmatpush.msra.mxu0 %v340
    %872 = vmatpush.msra.mxu0 %v337
    %873 = vmatpush.msra.mxu0 %v334
    %874 = vmatpush.msra.mxu0 %v331
    %875 = vmatpush.msra.mxu0 %v328
    %876 = vmatpush.msra.mxu0 %v325
    %877 = vmatpush.msra.mxu0 %v322
    %878 = vmatmul.f32.gmra.mxu0 %v861
    %v879 = vpop.f32.mrf.mxu0
    %v880 = vadd.f32 %v371, %v879
    %881 = vdwg.mxu0
    %882 = vmatpush.msra.mxu0 %v368
    %883 = vmatpush.msra.mxu0 %v365
    %884 = vmatpush.msra.mxu0 %v362
    %885 = vmatpush.msra.mxu0 %v359
    %886 = vmatpush.msra.mxu0 %v356
    %887 = vmatpush.msra.mxu0 %v353
    %888 = vmatpush.msra.mxu0 %v350
    %889 = vmatpush.msra.mxu0 %v347
    %890 = vmatpush.msra.mxu0 %v344
    %891 = vmatpush.msra.mxu0 %v341
    %892 = vmatpush.msra.mxu0 %v338
    %893 = vmatpush.msra.mxu0 %v335
    %894 = vmatpush.msra.mxu0 %v332
    %895 = vmatpush.msra.mxu0 %v329
    %896 = vmatpush.msra.mxu0 %v326
    %897 = vmatpush.msra.mxu0 %v323
    %898 = vmatmul.f32.gmra.mxu0 %v861
    %v899 = vpop.f32.mrf.mxu0
    %v900 = vadd.f32 %v372, %v899
    %901 = vdwg.mxu0
    %902 = vmatpush.msra.mxu0 %v369
    %903 = vmatpush.msra.mxu0 %v366
    %904 = vmatpush.msra.mxu0 %v363
    %905 = vmatpush.msra.mxu0 %v360
    %906 = vmatpush.msra.mxu0 %v357
    %907 = vmatpush.msra.mxu0 %v354
    %908 = vmatpush.msra.mxu0 %v351
    %909 = vmatpush.msra.mxu0 %v348
    %910 = vmatpush.msra.mxu0 %v345
    %911 = vmatpush.msra.mxu0 %v342
    %912 = vmatpush.msra.mxu0 %v339
    %913 = vmatpush.msra.mxu0 %v336
    %914 = vmatpush.msra.mxu0 %v333
    %915 = vmatpush.msra.mxu0 %v330
    %916 = vmatpush.msra.mxu0 %v327
    %917 = vmatpush.msra.mxu0 %v324
    %918 = vmatmul.f32.gmra.mxu0 %v861
    %v919 = vpop.f32.mrf.mxu0
    %v920 = vadd.f32 %v373, %v919
    %921 = vdwg.mxu0
    %v924 = vrot.slane %v900, 6
    %v925 = vsel %vm286, %v880, %v924
    %v927 = vadd.f32 %v307, %v925
    %v928 = vxor.u32 %v927, 2147483648
    %v929 = vmul.f32 %v928, 1.442695
    %v930 = vpow.pop %v929
    %v931 = vadd.f32 %v930, 1.0
    %v932 = vrcp.pop %v931
    %v933 = vmul.f32 %v931, %v932
    %v934 = vsub.f32 1.0, %v933
    %v935 = vmul.f32 %v932, %v934
    %v936 = vadd.f32 %v932, %v935
    %vm937 = vweird.f32 %v931
    %vm938 = vweird.f32 %v932
    %vm939 = vmor %vm937, %vm938
    %v940 = vsel %vm939, %v932, %v936
    %v941 = vand.u32 2147483647, %v931
    %vm942 = vcmp.eq.f32.partialorder %v941, 8.507059e+37
    %v943 = vand.u32 %v931, 2147483648
    %v944 = vor.u32 1.1754944e-38, %v943
    %v945 = vsel %vm942, %v944, %v940
    %v946 = vmul.f32 1.0, %v945
    %v947 = vmul.f32 %v946, %v920
    %v948 = vrot.slane %v307, 4
    %v950 = vadd.f32 %v948, %v947
    %v951 = vtanh.pop %v950
    %v953 = vrot.slane %v946, 2
    %v955 = vsub.f32 1.0, %v953
    %v956 = vmul.f32 %v955, %v951
    %v957 = vmul.f32 %v953, %v861
    %v958 = vadd.f32 %v956, %v957
    %959 = vmatpush.msra.mxu0 %v367
    %960 = vmatpush.msra.mxu0 %v364
    %961 = vmatpush.msra.mxu0 %v361
    %962 = vmatpush.msra.mxu0 %v358
    %963 = vmatpush.msra.mxu0 %v355
    %964 = vmatpush.msra.mxu0 %v352
    %965 = vmatpush.msra.mxu0 %v349
    %966 = vmatpush.msra.mxu0 %v346
    %967 = vmatpush.msra.mxu0 %v343
    %968 = vmatpush.msra.mxu0 %v340
    %969 = vmatpush.msra.mxu0 %v337
    %970 = vmatpush.msra.mxu0 %v334
    %971 = vmatpush.msra.mxu0 %v331
    %972 = vmatpush.msra.mxu0 %v328
    %973 = vmatpush.msra.mxu0 %v325
    %974 = vmatpush.msra.mxu0 %v322
    %975 = vmatmul.f32.gmra.mxu0 %v958
    %v976 = vpop.f32.mrf.mxu0
    %v977 = vadd.f32 %v371, %v976
    %978 = vdwg.mxu0
    %979 = vmatpush.msra.mxu0 %v368
    %980 = vmatpush.msra.mxu0 %v365
    %981 = vmatpush.msra.mxu0 %v362
    %982 = vmatpush.msra.mxu0 %v359
    %983 = vmatpush.msra.mxu0 %v356
    %984 = vmatpush.msra.mxu0 %v353
    %985 = vmatpush.msra.mxu0 %v350
    %986 = vmatpush.msra.mxu0 %v347
    %987 = vmatpush.msra.mxu0 %v344
    %988 = vmatpush.msra.mxu0 %v341
    %989 = vmatpush.msra.mxu0 %v338
    %990 = vmatpush.msra.mxu0 %v335
    %991 = vmatpush.msra.mxu0 %v332
    %992 = vmatpush.msra.mxu0 %v329
    %993 = vmatpush.msra.mxu0 %v326
    %994 = vmatpush.msra.mxu0 %v323
    %995 = vmatmul.f32.gmra.mxu0 %v958
    %v996 = vpop.f32.mrf.mxu0
    %v997 = vadd.f32 %v372, %v996
    %998 = vdwg.mxu0
    %999 = vmatpush.msra.mxu0 %v369
    %1000 = vmatpush.msra.mxu0 %v366
    %1001 = vmatpush.msra.mxu0 %v363
    %1002 = vmatpush.msra.mxu0 %v360
    %1003 = vmatpush.msra.mxu0 %v357
    %1004 = vmatpush.msra.mxu0 %v354
    %1005 = vmatpush.msra.mxu0 %v351
    %1006 = vmatpush.msra.mxu0 %v348
    %1007 = vmatpush.msra.mxu0 %v345
    %1008 = vmatpush.msra.mxu0 %v342
    %1009 = vmatpush.msra.mxu0 %v339
    %1010 = vmatpush.msra.mxu0 %v336
    %1011 = vmatpush.msra.mxu0 %v333
    %1012 = vmatpush.msra.mxu0 %v330
    %1013 = vmatpush.msra.mxu0 %v327
    %1014 = vmatpush.msra.mxu0 %v324
    %1015 = vmatmul.f32.gmra.mxu0 %v958
    %v1016 = vpop.f32.mrf.mxu0
    %v1017 = vadd.f32 %v373, %v1016
    %1018 = vdwg.mxu0
    %v1021 = vrot.slane %v997, 6
    %v1022 = vsel %vm286, %v977, %v1021
    %v1024 = vadd.f32 %v310, %v1022
    %v1025 = vxor.u32 %v1024, 2147483648
    %v1026 = vmul.f32 %v1025, 1.442695
    %v1027 = vpow.pop %v1026
    %v1028 = vadd.f32 %v1027, 1.0
    %v1029 = vrcp.pop %v1028
    %v1030 = vmul.f32 %v1028, %v1029
    %v1031 = vsub.f32 1.0, %v1030
    %v1032 = vmul.f32 %v1029, %v1031
    %v1033 = vadd.f32 %v1029, %v1032
    %vm1034 = vweird.f32 %v1028
    %vm1035 = vweird.f32 %v1029
    %vm1036 = vmor %vm1034, %vm1035
    %v1037 = vsel %vm1036, %v1029, %v1033
    %v1038 = vand.u32 2147483647, %v1028
    %vm1039 = vcmp.eq.f32.partialorder %v1038, 8.507059e+37
    %v1040 = vand.u32 %v1028, 2147483648
    %v1041 = vor.u32 1.1754944e-38, %v1040
    %v1042 = vsel %vm1039, %v1041, %v1037
    %v1043 = vmul.f32 1.0, %v1042
    %v1044 = vmul.f32 %v1043, %v1017
    %v1045 = vrot.slane %v310, 4
    %v1047 = vadd.f32 %v1045, %v1044
    %v1048 = vtanh.pop %v1047
    %v1050 = vrot.slane %v1043, 2
    %v1052 = vsub.f32 1.0, %v1050
    %v1053 = vmul.f32 %v1052, %v1048
    %v1054 = vmul.f32 %v1050, %v958
    %v1055 = vadd.f32 %v1053, %v1054
    %1056 = vmatpush.msra.mxu0 %v367
    %1057 = vmatpush.msra.mxu0 %v364
    %1058 = vmatpush.msra.mxu0 %v361
    %1059 = vmatpush.msra.mxu0 %v358
    %1060 = vmatpush.msra.mxu0 %v355
    %1061 = vmatpush.msra.mxu0 %v352
    %1062 = vmatpush.msra.mxu0 %v349
    %1063 = vmatpush.msra.mxu0 %v346
    %1064 = vmatpush.msra.mxu0 %v343
    %1065 = vmatpush.msra.mxu0 %v340
    %1066 = vmatpush.msra.mxu0 %v337
    %1067 = vmatpush.msra.mxu0 %v334
    %1068 = vmatpush.msra.mxu0 %v331
    %1069 = vmatpush.msra.mxu0 %v328
    %1070 = vmatpush.msra.mxu0 %v325
    %1071 = vmatpush.msra.mxu0 %v322
    %1072 = vmatmul.f32.gmra.mxu0 %v1055
    %v1073 = vpop.f32.mrf.mxu0
    %v1074 = vadd.f32 %v371, %v1073
    %1075 = vdwg.mxu0
    %1076 = vmatpush.msra.mxu0 %v368
    %1077 = vmatpush.msra.mxu0 %v365
    %1078 = vmatpush.msra.mxu0 %v362
    %1079 = vmatpush.msra.mxu0 %v359
    %1080 = vmatpush.msra.mxu0 %v356
    %1081 = vmatpush.msra.mxu0 %v353
    %1082 = vmatpush.msra.mxu0 %v350
    %1083 = vmatpush.msra.mxu0 %v347
    %1084 = vmatpush.msra.mxu0 %v344
    %1085 = vmatpush.msra.mxu0 %v341
    %1086 = vmatpush.msra.mxu0 %v338
    %1087 = vmatpush.msra.mxu0 %v335
    %1088 = vmatpush.msra.mxu0 %v332
    %1089 = vmatpush.msra.mxu0 %v329
    %1090 = vmatpush.msra.mxu0 %v326
    %1091 = vmatpush.msra.mxu0 %v323
    %1092 = vmatmul.f32.gmra.mxu0 %v1055
    %v1093 = vpop.f32.mrf.mxu0
    %v1094 = vadd.f32 %v372, %v1093
    %1095 = vdwg.mxu0
    %1096 = vmatpush.msra.mxu0 %v369
    %1097 = vmatpush.msra.mxu0 %v366
    %1098 = vmatpush.msra.mxu0 %v363
    %1099 = vmatpush.msra.mxu0 %v360
    %1100 = vmatpush.msra.mxu0 %v357
    %1101 = vmatpush.msra.mxu0 %v354
    %1102 = vmatpush.msra.mxu0 %v351
    %1103 = vmatpush.msra.mxu0 %v348
    %1104 = vmatpush.msra.mxu0 %v345
    %1105 = vmatpush.msra.mxu0 %v342
    %1106 = vmatpush.msra.mxu0 %v339
    %1107 = vmatpush.msra.mxu0 %v336
    %1108 = vmatpush.msra.mxu0 %v333
    %1109 = vmatpush.msra.mxu0 %v330
    %1110 = vmatpush.msra.mxu0 %v327
    %1111 = vmatpush.msra.mxu0 %v324
    %1112 = vmatmul.f32.gmra.mxu0 %v1055
    %v1113 = vpop.f32.mrf.mxu0
    %v1114 = vadd.f32 %v373, %v1113
    %1115 = vdwg.mxu0
    %v1118 = vrot.slane %v1094, 6
    %v1119 = vsel %vm286, %v1074, %v1118
    %v1121 = vadd.f32 %v313, %v1119
    %v1122 = vxor.u32 %v1121, 2147483648
    %v1123 = vmul.f32 %v1122, 1.442695
    %v1124 = vpow.pop %v1123
    %v1125 = vadd.f32 %v1124, 1.0
    %v1126 = vrcp.pop %v1125
    %v1127 = vmul.f32 %v1125, %v1126
    %v1128 = vsub.f32 1.0, %v1127
    %v1129 = vmul.f32 %v1126, %v1128
    %v1130 = vadd.f32 %v1126, %v1129
    %vm1131 = vweird.f32 %v1125
    %vm1132 = vweird.f32 %v1126
    %vm1133 = vmor %vm1131, %vm1132
    %v1134 = vsel %vm1133, %v1126, %v1130
    %v1135 = vand.u32 2147483647, %v1125
    %vm1136 = vcmp.eq.f32.partialorder %v1135, 8.507059e+37
    %v1137 = vand.u32 %v1125, 2147483648
    %v1138 = vor.u32 1.1754944e-38, %v1137
    %v1139 = vsel %vm1136, %v1138, %v1134
    %v1140 = vmul.f32 1.0, %v1139
    %v1141 = vmul.f32 %v1140, %v1114
    %v1142 = vrot.slane %v313, 4
    %v1144 = vadd.f32 %v1142, %v1141
    %v1145 = vtanh.pop %v1144
    %v1147 = vrot.slane %v1140, 2
    %v1149 = vsub.f32 1.0, %v1147
    %v1150 = vmul.f32 %v1149, %v1145
    %v1151 = vmul.f32 %v1147, %v1055
    %v1152 = vadd.f32 %v1150, %v1151
    %v1153 = vld [vmem:[%s6] sm:$0xff]
    %v1154 = vld [vmem:[%s6 + $0x8] sm:$0xff]
    %v1155 = vld [vmem:[%s6 + $0x10] sm:$0xff]
    %v1156 = vld [vmem:[%s6 + $0x18] sm:$0xff]
    %v1157 = vld [vmem:[%s6 + $0x20] sm:$0xff]
    %v1158 = vld [vmem:[%s6 + $0x28] sm:$0xff]
    %v1159 = vld [vmem:[%s6 + $0x30] sm:$0xff]
    %v1160 = vld [vmem:[%s6 + $0x38] sm:$0xff]
    %v1161 = vld [vmem:[%s6 + $0x40] sm:$0xff]
    %v1162 = vld [vmem:[%s6 + $0x48] sm:$0xff]
    %v1163 = vld [vmem:[%s6 + $0x50] sm:$0xff]
    %v1164 = vld [vmem:[%s6 + $0x58] sm:$0xff]
    %v1165 = vld [vmem:[%s6 + $0x60] sm:$0xff]
    %v1166 = vld [vmem:[%s6 + $0x68] sm:$0xff]
    %v1167 = vld [vmem:[%s6 + $0x70] sm:$0xff]
    %v1168 = vld [vmem:[%s6 + $0x78] sm:$0xff]
    %v1169 = vld [vmem:[%s7] sm:$0x1]
    %v1171 = vperm.slane %v1169, 0
    %1173 = vmatpush.msra.mxu0 %v1168
    %1174 = vmatpush.msra.mxu0 %v1167
    %1175 = vmatpush.msra.mxu0 %v1166
    %1176 = vmatpush.msra.mxu0 %v1165
    %1177 = vmatpush.msra.mxu0 %v1164
    %1178 = vmatpush.msra.mxu0 %v1163
    %1179 = vmatpush.msra.mxu0 %v1162
    %1180 = vmatpush.msra.mxu0 %v1161
    %1181 = vmatpush.msra.mxu0 %v1160
    %1182 = vmatpush.msra.mxu0 %v1159
    %1183 = vmatpush.msra.mxu0 %v1158
    %1184 = vmatpush.msra.mxu0 %v1157
    %1185 = vmatpush.msra.mxu0 %v1156
    %1186 = vmatpush.msra.mxu0 %v1155
    %1187 = vmatpush.msra.mxu0 %v1154
    %1188 = vmatpush.msra.mxu0 %v1153
    %1189 = vmatmul.f32.gmra.mxu0 %v1152
    %v1190 = vpop.f32.mrf.mxu0
    %v1191 = vadd.f32 %v1171, %v1190
    %1192 = vdwg.mxu0
    %vm1193 = vcmask 33792
    %1194 = vst.msk [vmem:[#allocation5] sm:$0x3] %vm1193, %v1191
    // Predicated region
    $region38: #{tpu_custom_call.1} parent=1 // pred_check
      _
    $region39: #{tpu_custom_call.1} parent=1 // pred_check_branch
      %1196 = sbr.rel (0) target = $region41
    $region40: #{tpu_custom_call.1} parent=1 // pred_region
      %1198 = vsyncadd [#allocation4], 0
      %s1200 = sshll.u32 [#allocation5], 4
      %s1201 = int_to_ptr.vmem [resolvable:$true] %s1200
      %s1202 = sshll.u32 %s8, 4
      %s1203 = int_to_ptr.hbm [resolvable:$true] %s1202
      %1205 = dma.vmem_to_hbm [thread:$0]  %s1201, 32, %s1203, [#allocation4]
    $region41: #{tpu_custom_call.1} parent=1 // pred_fallthru
      _
    // Predicated region
    $region42: #{tpu_custom_call.1} parent=1 // pred_check
      _
    $region43: #{tpu_custom_call.1} parent=1 // pred_check_branch
      %1207 = sbr.rel (0) target = $region45
    $region44: #{tpu_custom_call.1} parent=1 // pred_region
      %1209 = dma.done [#allocation4], 32
    $region45: #{tpu_custom_call.1} parent=1 // pred_fallthru
      _
    %1210 = vsyncpa [#allocation3], 1
    %1211 = vsyncpa [#allocation4], 1

</llo_original>
